<compile_context>
chip_gen: v7x
topology: tpu7x:2x2x1
jax: 0.10.0
libtpu: 0.0.40
codegen_flags: <defaults>
</compile_context>

<pallas_src>
import functools

import jax
import jax.numpy as jnp
from jax import lax
from jax.experimental import pallas as pl
from jax.experimental.pallas import tpu as pltpu

NUM_FEATURES = 4          # dataset.num_features (SpectralDesign dv=4)
H1, H2, H3 = 32, 64, 64
F1, F2 = 32, 1

NODE_TILE = 512           # rows of nodes per grid step (multiple of 8)
NUM_SPLITS = 2            # leading parallel axis -> both TCs on v7x


def _round_up(x, m):
    return ((x + m - 1) // m) * m


# --------------------------------------------------------------------------
# Kernel 1: fused node MLP (conv1/conv2/conv3 + ReLU) + mean-pool accumulation.
# --------------------------------------------------------------------------
def fused_node_pool_kernel(bid_ref, wv_ref, x_ref,
                           w1_ref, b1_ref, w2_ref, b2_ref, w3_ref, b3_ref,
                           part_ref, acc_ref, *, g_pad):
    t = pl.program_id(1)

    @pl.when(t == 0)
    def _():
        acc_ref[...] = jnp.zeros_like(acc_ref)

    x = x_ref[...]
    h = jnp.maximum(
        jnp.dot(x, w1_ref[...], preferred_element_type=jnp.float32) + b1_ref[...], 0.0)
    # F.dropout(p=0.3) is identity in eval mode
    h = jnp.maximum(
        jnp.dot(h, w2_ref[...], preferred_element_type=jnp.float32) + b2_ref[...], 0.0)
    h = jnp.maximum(
        jnp.dot(h, w3_ref[...], preferred_element_type=jnp.float32) + b3_ref[...], 0.0)

    # In-kernel normalized one-hot: assign[g, n] = (batch[n] == g) * 1/count[g]
    # (weight is 0 for padded nodes, so their nonzero ReLU(b) output is masked).
    g_ids = lax.broadcasted_iota(jnp.int32, (g_pad, NODE_TILE), 0)
    assign = jnp.where(bid_ref[...] == g_ids, wv_ref[...], 0.0)
    acc_ref[...] += jnp.dot(assign, h, preferred_element_type=jnp.float32)

    @pl.when(t == pl.num_programs(1) - 1)
    def _():
        part_ref[...] = acc_ref[...]


def fused_node_pool(bid, wvec, x_pad, w1, b1, w2, b2, w3, b3, g_pad):
    n_pad, f = x_pad.shape
    tiles = n_pad // NODE_TILE
    t_per_split = tiles // NUM_SPLITS

    def full2(arr):
        return pl.BlockSpec(arr.shape, lambda s, t: (0, 0))

    kernel = functools.partial(fused_node_pool_kernel, g_pad=g_pad)

    return pl.pallas_call(
        kernel,
        out_shape=jax.ShapeDtypeStruct((NUM_SPLITS, g_pad, H3), jnp.float32),
        grid=(NUM_SPLITS, t_per_split),
        in_specs=[
            pl.BlockSpec((1, NODE_TILE), lambda s, t: (0, s * t_per_split + t)),
            pl.BlockSpec((1, NODE_TILE), lambda s, t: (0, s * t_per_split + t)),
            pl.BlockSpec((NODE_TILE, f), lambda s, t: (s * t_per_split + t, 0)),
            full2(w1), full2(b1), full2(w2), full2(b2), full2(w3), full2(b3),
        ],
        out_specs=pl.BlockSpec((None, g_pad, H3), lambda s, t: (s, 0, 0)),
        scratch_shapes=[pltpu.VMEM((g_pad, H3), jnp.float32)],
        compiler_params=pltpu.CompilerParams(
            dimension_semantics=("parallel", "arbitrary")),
    )(bid, wvec, x_pad, w1, b1, w2, b2, w3, b3)


# --------------------------------------------------------------------------
# Kernel 2: combine per-split partial pooled sums, then fc1+ReLU and fc2.
# --------------------------------------------------------------------------
def head_kernel(part_ref, w4_ref, b4_ref, w5_ref, b5_ref, out_ref):
    pooled = jnp.sum(part_ref[...], axis=0)                       # (G_pad, H3)
    z = jnp.maximum(
        jnp.dot(pooled, w4_ref[...], preferred_element_type=jnp.float32) + b4_ref[...],
        0.0)
    out_ref[...] = (
        jnp.dot(z, w5_ref[...], preferred_element_type=jnp.float32) + b5_ref[...]
    ).astype(out_ref.dtype)


def head(partials, w4, b4, w5, b5):
    g_pad = partials.shape[1]

    def full(arr):
        nd = arr.ndim
        return pl.BlockSpec(arr.shape, lambda i, _nd=nd: (0,) * _nd)

    return pl.pallas_call(
        head_kernel,
        out_shape=jax.ShapeDtypeStruct((g_pad, F2), jnp.float32),
        grid=(1,),
        in_specs=[full(partials), full(w4), full(b4), full(w5), full(b5)],
        out_specs=pl.BlockSpec((g_pad, F2), lambda i: (0, 0)),
    )(partials, w4, b4, w5, b5)


# --------------------------------------------------------------------------
# Parameter init (PyTorch Linear-style uniform(+-1/sqrt(fan_in)))
# --------------------------------------------------------------------------
def init_linear(key, fan_in, fan_out):
    kw, kb = jax.random.split(key)
    bound = 1.0 / jnp.sqrt(float(fan_in))
    w = jax.random.uniform(kw, (fan_in, fan_out), jnp.float32, -bound, bound)
    b = jax.random.uniform(kb, (1, fan_out), jnp.float32, -bound, bound)
    return w, b


@functools.partial(jax.jit, static_argnames=("num_graphs",))
def mlpnet_forward(params, x, batch, num_graphs):
    (w1, b1), (w2, b2), (w3, b3), (w4, b4), (w5, b5) = params

    n = x.shape[0]
    tiles = max(1, -(-n // NODE_TILE))
    tiles = _round_up(tiles, NUM_SPLITS)
    n_pad = tiles * NODE_TILE
    g_pad = _round_up(max(num_graphs, 1), 8)

    x_pad = jnp.pad(x, ((0, n_pad - n), (0, 0)))

    # per-node graph id + mean-pool weight; padded rows get id=-1, weight=0
    counts = jax.ops.segment_sum(jnp.ones((n,), jnp.float32), batch,
                                 num_segments=num_graphs)
    inv_counts = 1.0 / jnp.maximum(counts, 1.0)
    node_w = inv_counts[batch]
    wvec = jnp.zeros((n_pad,), jnp.float32).at[:n].set(node_w).reshape(1, n_pad)
    bid = (jnp.full((n_pad,), -1, jnp.int32)
           .at[:n].set(batch.astype(jnp.int32)).reshape(1, n_pad))

    partials = fused_node_pool(bid, wvec, x_pad, w1, b1, w2, b2, w3, b3, g_pad)
    out = head(partials, w4, b4, w5, b5)
    return out[:num_graphs]


def reference_forward(params, x, batch, num_graphs):
    (w1, b1), (w2, b2), (w3, b3), (w4, b4), (w5, b5) = params
    h = jnp.maximum(x @ w1 + b1, 0.0)
    h = jnp.maximum(h @ w2 + b2, 0.0)
    h = jnp.maximum(h @ w3 + b3, 0.0)
    sums = jax.ops.segment_sum(h, batch, num_segments=num_graphs)
    cnts = jax.ops.segment_sum(jnp.ones((x.shape[0], 1)), batch,
                               num_segments=num_graphs)
    pooled = sums / jnp.maximum(cnts, 1.0)
    z = jnp.maximum(pooled @ w4 + b4, 0.0)
    return z @ w5 + b5


if __name__ == "__main__":
    key = jax.random.PRNGKey(0)
    k_params, k_x = jax.random.split(key)
    ks = jax.random.split(k_params, 5)

    params = (
        init_linear(ks[0], NUM_FEATURES, H1),
        init_linear(ks[1], H1, H2),
        init_linear(ks[2], H2, H3),
        init_linear(ks[3], H3, F1),
        init_linear(ks[4], F1, F2),
    )

    # 2 graphs: 7 nodes + 9 nodes = 16 nodes, 4 features each
    num_graphs = 2
    x = jax.random.normal(k_x, (16, NUM_FEATURES), jnp.float32)
    batch = jnp.array([0] * 7 + [1] * 9, dtype=jnp.int32)

    out = mlpnet_forward(params, x, batch, num_graphs)
    out = jax.block_until_ready(out)

    ref = reference_forward(params, x, batch, num_graphs)
    assert out.shape == (num_graphs, 1)
    assert jnp.allclose(out, ref, atol=1e-4, rtol=1e-4), (out, ref)

    print("KERNEL_OK")
</pallas_src>

<mosaic_0001>
module attributes {stable_mosaic.version = 11 : i64} {
  func.func private @main(%arg0: i32) attributes {dimension_semantics = [#tpu.dimension_semantics<core_parallel>], iteration_bounds = array<i64: 2>, tpu.core_type = #tpu.core_type<sc_scalar_subcore>, window_params = []} {
    return
  }
}

module attributes {stable_mosaic.version = 11 : i64} {
  func.func private @main(%arg0: i32) attributes {dimension_semantics = [#tpu.dimension_semantics<core_parallel>], iteration_bounds = array<i64: 2>, tpu.core_type = #tpu.core_type<sc_scalar_subcore>, window_params = []} {
    return
  }
}

module attributes {stable_mosaic.version = 11 : i64} {
  func.func @fused_node_pool_kernel(%arg0: i32, %arg1: i32, %arg2: memref<1x512xi32, #tpu.memory_space<vmem>>, %arg3: memref<1x512xf32, #tpu.memory_space<vmem>>, %arg4: memref<512x4xf32, #tpu.memory_space<vmem>>, %arg5: memref<4x32xf32, #tpu.memory_space<vmem>>, %arg6: memref<1x32xf32, #tpu.memory_space<vmem>>, %arg7: memref<32x64xf32, #tpu.memory_space<vmem>>, %arg8: memref<1x64xf32, #tpu.memory_space<vmem>>, %arg9: memref<64x64xf32, #tpu.memory_space<vmem>>, %arg10: memref<1x64xf32, #tpu.memory_space<vmem>>, %arg11: memref<1x8x64xf32, #tpu.memory_space<vmem>>, %arg12: memref<8x64xf32, #tpu.memory_space<vmem>>) attributes {dimension_semantics = [#tpu.dimension_semantics<parallel>, #tpu.dimension_semantics<arbitrary>], iteration_bounds = array<i64: 2, 1>, scalar_prefetch = 0 : i64, scratch_operands = 1 : i64, tpu.core_type = #tpu.core_type<tc>, window_params = [{transform_indices = @transform_0, window_bounds = array<i64: 1, 512>}, {transform_indices = @transform_1, window_bounds = array<i64: 1, 512>}, {transform_indices = @transform_2, window_bounds = array<i64: 512, 4>}, {pipeline_mode = #tpu.pipeline_mode<synchronous>, transform_indices = @transform_3, window_bounds = array<i64: 4, 32>}, {pipeline_mode = #tpu.pipeline_mode<synchronous>, transform_indices = @transform_4, window_bounds = array<i64: 1, 32>}, {pipeline_mode = #tpu.pipeline_mode<synchronous>, transform_indices = @transform_5, window_bounds = array<i64: 32, 64>}, {pipeline_mode = #tpu.pipeline_mode<synchronous>, transform_indices = @transform_6, window_bounds = array<i64: 1, 64>}, {pipeline_mode = #tpu.pipeline_mode<synchronous>, transform_indices = @transform_7, window_bounds = array<i64: 64, 64>}, {pipeline_mode = #tpu.pipeline_mode<synchronous>, transform_indices = @transform_8, window_bounds = array<i64: 1, 64>}, {transform_indices = @transform_9, window_bounds = array<i64: 1, 8, 64>}]} {
    %c0_i32 = arith.constant 0 : i32
    %0 = arith.cmpi eq, %arg1, %c0_i32 : i32
    %1 = arith.extui %0 : i1 to i32
    %c0_i32_0 = arith.constant 0 : i32
    %2 = arith.cmpi ne, %1, %c0_i32_0 : i32
    scf.if %2 {
      %cst_31 = arith.constant 0.000000e+00 : f32
      %41 = vector.broadcast %cst_31 : f32 to vector<8x64xf32>
      %c0_32 = arith.constant 0 : index
      %c0_33 = arith.constant 0 : index
      %42 = vector.load %arg12[%c0_32, %c0_33] : memref<8x64xf32, #tpu.memory_space<vmem>>, vector<8x64xf32>
      tpu.vector_store %arg12[%c0_32, %c0_33], %41 {strides = array<i32>} : memref<8x64xf32, #tpu.memory_space<vmem>>, vector<8x64xf32>,
    } else {
    }
    %c0 = arith.constant 0 : index
    %c0_1 = arith.constant 0 : index
    %3 = vector.load %arg4[%c0, %c0_1] : memref<512x4xf32, #tpu.memory_space<vmem>>, vector<512x4xf32>
    %c0_2 = arith.constant 0 : index
    %c0_3 = arith.constant 0 : index
    %4 = vector.load %arg5[%c0_2, %c0_3] : memref<4x32xf32, #tpu.memory_space<vmem>>, vector<4x32xf32>
    %cst = arith.constant dense<0.000000e+00> : vector<512x32xf32>
    %5 = tpu.matmul %3, %4, %cst {dimension_numbers = #tpu.dot_dimension_numbers<[1], [0], [0], [1], [0, 0, 1, 1], [], []>} : vector<512x4xf32>, vector<4x32xf32>, vector<512x32xf32> -> vector<512x32xf32>
    %c0_4 = arith.constant 0 : index
    %c0_5 = arith.constant 0 : index
    %6 = vector.load %arg6[%c0_4, %c0_5] : memref<1x32xf32, #tpu.memory_space<vmem>>, vector<1x32xf32>
    %7 = vector.broadcast %6 : vector<1x32xf32> to vector<512x32xf32>
    %8 = arith.addf %5, %7 : vector<512x32xf32>
    %cst_6 = arith.constant 0.000000e+00 : f32
    %9 = vector.broadcast %cst_6 : f32 to vector<512x32xf32>
    %10 = arith.maximumf %8, %9 : vector<512x32xf32>
    %c0_7 = arith.constant 0 : index
    %c0_8 = arith.constant 0 : index
    %11 = vector.load %arg7[%c0_7, %c0_8] : memref<32x64xf32, #tpu.memory_space<vmem>>, vector<32x64xf32>
    %cst_9 = arith.constant dense<0.000000e+00> : vector<512x64xf32>
    %12 = tpu.matmul %10, %11, %cst_9 {dimension_numbers = #tpu.dot_dimension_numbers<[1], [0], [0], [1], [0, 0, 1, 1], [], []>} : vector<512x32xf32>, vector<32x64xf32>, vector<512x64xf32> -> vector<512x64xf32>
    %c0_10 = arith.constant 0 : index
    %c0_11 = arith.constant 0 : index
    %13 = vector.load %arg8[%c0_10, %c0_11] : memref<1x64xf32, #tpu.memory_space<vmem>>, vector<1x64xf32>
    %14 = vector.broadcast %13 : vector<1x64xf32> to vector<512x64xf32>
    %15 = arith.addf %12, %14 : vector<512x64xf32>
    %cst_12 = arith.constant 0.000000e+00 : f32
    %16 = vector.broadcast %cst_12 : f32 to vector<512x64xf32>
    %17 = arith.maximumf %15, %16 : vector<512x64xf32>
    %c0_13 = arith.constant 0 : index
    %c0_14 = arith.constant 0 : index
    %18 = vector.load %arg9[%c0_13, %c0_14] : memref<64x64xf32, #tpu.memory_space<vmem>>, vector<64x64xf32>
    %cst_15 = arith.constant dense<0.000000e+00> : vector<512x64xf32>
    %19 = tpu.matmul %17, %18, %cst_15 {dimension_numbers = #tpu.dot_dimension_numbers<[1], [0], [0], [1], [0, 0, 1, 1], [], []>} : vector<512x64xf32>, vector<64x64xf32>, vector<512x64xf32> -> vector<512x64xf32>
    %c0_16 = arith.constant 0 : index
    %c0_17 = arith.constant 0 : index
    %20 = vector.load %arg10[%c0_16, %c0_17] : memref<1x64xf32, #tpu.memory_space<vmem>>, vector<1x64xf32>
    %21 = vector.broadcast %20 : vector<1x64xf32> to vector<512x64xf32>
    %22 = arith.addf %19, %21 : vector<512x64xf32>
    %cst_18 = arith.constant 0.000000e+00 : f32
    %23 = vector.broadcast %cst_18 : f32 to vector<512x64xf32>
    %24 = arith.maximumf %22, %23 : vector<512x64xf32>
    %25 = tpu.iota {dimensions = array<i32: 0>} : vector<8x512xi32>
    %c0_19 = arith.constant 0 : index
    %c0_20 = arith.constant 0 : index
    %26 = vector.load %arg2[%c0_19, %c0_20] : memref<1x512xi32, #tpu.memory_space<vmem>>, vector<1x512xi32>
    %27 = vector.broadcast %26 : vector<1x512xi32> to vector<8x512xi32>
    %28 = arith.cmpi eq, %27, %25 : vector<8x512xi32>
    %c0_21 = arith.constant 0 : index
    %c0_22 = arith.constant 0 : index
    %29 = vector.load %arg3[%c0_21, %c0_22] : memref<1x512xf32, #tpu.memory_space<vmem>>, vector<1x512xf32>
    %cst_23 = arith.constant 0.000000e+00 : f32
    %30 = vector.shape_cast %29 : vector<1x512xf32> to vector<1x512xf32>
    %31 = vector.broadcast %30 : vector<1x512xf32> to vector<8x512xf32>
    %32 = vector.broadcast %cst_23 : f32 to vector<8x512xf32>
    %33 = arith.select %28, %31, %32 : vector<8x512xi1>, vector<8x512xf32>
    %c0_24 = arith.constant 0 : index
    %c0_25 = arith.constant 0 : index
    %34 = vector.load %arg12[%c0_24, %c0_25] : memref<8x64xf32, #tpu.memory_space<vmem>>, vector<8x64xf32>
    %cst_26 = arith.constant dense<0.000000e+00> : vector<8x64xf32>
    %35 = tpu.matmul %33, %24, %cst_26 {dimension_numbers = #tpu.dot_dimension_numbers<[1], [0], [0], [1], [0, 0, 1, 1], [], []>} : vector<8x512xf32>, vector<512x64xf32>, vector<8x64xf32> -> vector<8x64xf32>
    %36 = arith.addf %34, %35 : vector<8x64xf32>
    %c0_27 = arith.constant 0 : index
    %c0_28 = arith.constant 0 : index
    %37 = vector.load %arg12[%c0_27, %c0_28] : memref<8x64xf32, #tpu.memory_space<vmem>>, vector<8x64xf32>
    tpu.vector_store %arg12[%c0_27, %c0_28], %36 {strides = array<i32>} : memref<8x64xf32, #tpu.memory_space<vmem>>, vector<8x64xf32>,
    %c0_i32_29 = arith.constant 0 : i32
    %38 = arith.cmpi eq, %arg1, %c0_i32_29 : i32
    %39 = arith.extui %38 : i1 to i32
    %c0_i32_30 = arith.constant 0 : i32
    %40 = arith.cmpi ne, %39, %c0_i32_30 : i32
    scf.if %40 {
      %c0_31 = arith.constant 0 : index
      %c0_32 = arith.constant 0 : index
      %41 = vector.load %arg12[%c0_31, %c0_32] : memref<8x64xf32, #tpu.memory_space<vmem>>, vector<8x64xf32>
      %c0_33 = arith.constant 0 : index
      %c0_34 = arith.constant 0 : index
      %c0_35 = arith.constant 0 : index
      %42 = vector.load %arg11[%c0_33, %c0_34, %c0_35] : memref<1x8x64xf32, #tpu.memory_space<vmem>>, vector<1x8x64xf32>
      %43 = vector.shape_cast %42 : vector<1x8x64xf32> to vector<8x64xf32>
      %44 = vector.shape_cast %41 : vector<8x64xf32> to vector<1x8x64xf32>
      tpu.vector_store %arg11[%c0_33, %c0_34, %c0_35], %44 {strides = array<i32>} : memref<1x8x64xf32, #tpu.memory_space<vmem>>, vector<1x8x64xf32>,
    } else {
    }
    return
  }
  func.func @transform_0(%arg0: i32, %arg1: i32) -> (i32, i32) {
    %c1_i32 = arith.constant 1 : i32
    %0 = arith.muli %arg0, %c1_i32 : i32
    %1 = arith.addi %0, %arg1 : i32
    %c0_i32 = arith.constant 0 : i32
    %c0_i32_0 = arith.constant 0 : i32
    return %c0_i32, %1 : i32, i32
  }
  func.func @transform_1(%arg0: i32, %arg1: i32) -> (i32, i32) {
    %c1_i32 = arith.constant 1 : i32
    %0 = arith.muli %arg0, %c1_i32 : i32
    %1 = arith.addi %0, %arg1 : i32
    %c0_i32 = arith.constant 0 : i32
    %c0_i32_0 = arith.constant 0 : i32
    return %c0_i32, %1 : i32, i32
  }
  func.func @transform_2(%arg0: i32, %arg1: i32) -> (i32, i32) {
    %c1_i32 = arith.constant 1 : i32
    %0 = arith.muli %arg0, %c1_i32 : i32
    %1 = arith.addi %0, %arg1 : i32
    %c0_i32 = arith.constant 0 : i32
    %c0_i32_0 = arith.constant 0 : i32
    return %1, %c0_i32 : i32, i32
  }
  func.func @transform_3(%arg0: i32, %arg1: i32) -> (i32, i32) {
    %c0_i32 = arith.constant 0 : i32
    %c0_i32_0 = arith.constant 0 : i32
    %c0_i32_1 = arith.constant 0 : i32
    return %c0_i32, %c0_i32_0 : i32, i32
  }
  func.func @transform_4(%arg0: i32, %arg1: i32) -> (i32, i32) {
    %c0_i32 = arith.constant 0 : i32
    %c0_i32_0 = arith.constant 0 : i32
    %c0_i32_1 = arith.constant 0 : i32
    return %c0_i32, %c0_i32_0 : i32, i32
  }
  func.func @transform_5(%arg0: i32, %arg1: i32) -> (i32, i32) {
    %c0_i32 = arith.constant 0 : i32
    %c0_i32_0 = arith.constant 0 : i32
    %c0_i32_1 = arith.constant 0 : i32
    return %c0_i32, %c0_i32_0 : i32, i32
  }
  func.func @transform_6(%arg0: i32, %arg1: i32) -> (i32, i32) {
    %c0_i32 = arith.constant 0 : i32
    %c0_i32_0 = arith.constant 0 : i32
    %c0_i32_1 = arith.constant 0 : i32
    return %c0_i32, %c0_i32_0 : i32, i32
  }
  func.func @transform_7(%arg0: i32, %arg1: i32) -> (i32, i32) {
    %c0_i32 = arith.constant 0 : i32
    %c0_i32_0 = arith.constant 0 : i32
    %c0_i32_1 = arith.constant 0 : i32
    return %c0_i32, %c0_i32_0 : i32, i32
  }
  func.func @transform_8(%arg0: i32, %arg1: i32) -> (i32, i32) {
    %c0_i32 = arith.constant 0 : i32
    %c0_i32_0 = arith.constant 0 : i32
    %c0_i32_1 = arith.constant 0 : i32
    return %c0_i32, %c0_i32_0 : i32, i32
  }
  func.func @transform_9(%arg0: i32, %arg1: i32) -> (i32, i32, i32) {
    %c0_i32 = arith.constant 0 : i32
    %c0_i32_0 = arith.constant 0 : i32
    %c0_i32_1 = arith.constant 0 : i32
    return %arg0, %c0_i32, %c0_i32_0 : i32, i32, i32
  }
}

module attributes {stable_mosaic.version = 11 : i64} {
  func.func @head_kernel(%arg0: i32, %arg1: memref<2x8x64xf32, #tpu.memory_space<vmem>>, %arg2: memref<64x32xf32, #tpu.memory_space<vmem>>, %arg3: memref<1x32xf32, #tpu.memory_space<vmem>>, %arg4: memref<32x1xf32, #tpu.memory_space<vmem>>, %arg5: memref<1x1xf32, #tpu.memory_space<vmem>>, %arg6: memref<8x1xf32, #tpu.memory_space<vmem>>) attributes {dimension_semantics = [#tpu.dimension_semantics<arbitrary>], iteration_bounds = array<i64: 1>, scalar_prefetch = 0 : i64, scratch_operands = 0 : i64, tpu.core_type = #tpu.core_type<tc>, window_params = [{pipeline_mode = #tpu.pipeline_mode<synchronous>, transform_indices = @transform_0, window_bounds = array<i64: 2, 8, 64>}, {pipeline_mode = #tpu.pipeline_mode<synchronous>, transform_indices = @transform_1, window_bounds = array<i64: 64, 32>}, {pipeline_mode = #tpu.pipeline_mode<synchronous>, transform_indices = @transform_2, window_bounds = array<i64: 1, 32>}, {pipeline_mode = #tpu.pipeline_mode<synchronous>, transform_indices = @transform_3, window_bounds = array<i64: 32, 1>}, {pipeline_mode = #tpu.pipeline_mode<synchronous>, transform_indices = @transform_4, window_bounds = array<i64: 1, 1>}, {pipeline_mode = #tpu.pipeline_mode<synchronous>, transform_indices = @transform_5, window_bounds = array<i64: 8, 1>}]} {
    %c0 = arith.constant 0 : index
    %c0_0 = arith.constant 0 : index
    %c0_1 = arith.constant 0 : index
    %0 = vector.load %arg1[%c0, %c0_0, %c0_1] : memref<2x8x64xf32, #tpu.memory_space<vmem>>, vector<2x8x64xf32>
    %cst = arith.constant dense<0.000000e+00> : vector<8x64xf32>
    %1 = vector.multi_reduction <add>, %0, %cst [0] : vector<2x8x64xf32> to vector<8x64xf32>
    %c0_2 = arith.constant 0 : index
    %c0_3 = arith.constant 0 : index
    %2 = vector.load %arg2[%c0_2, %c0_3] : memref<64x32xf32, #tpu.memory_space<vmem>>, vector<64x32xf32>
    %cst_4 = arith.constant dense<0.000000e+00> : vector<8x32xf32>
    %3 = tpu.matmul %1, %2, %cst_4 {dimension_numbers = #tpu.dot_dimension_numbers<[1], [0], [0], [1], [0, 0, 1, 1], [], []>} : vector<8x64xf32>, vector<64x32xf32>, vector<8x32xf32> -> vector<8x32xf32>
    %c0_5 = arith.constant 0 : index
    %c0_6 = arith.constant 0 : index
    %4 = vector.load %arg3[%c0_5, %c0_6] : memref<1x32xf32, #tpu.memory_space<vmem>>, vector<1x32xf32>
    %5 = vector.broadcast %4 : vector<1x32xf32> to vector<8x32xf32>
    %6 = arith.addf %3, %5 : vector<8x32xf32>
    %cst_7 = arith.constant 0.000000e+00 : f32
    %7 = vector.broadcast %cst_7 : f32 to vector<8x32xf32>
    %8 = arith.maximumf %6, %7 : vector<8x32xf32>
    %c0_8 = arith.constant 0 : index
    %c0_9 = arith.constant 0 : index
    %9 = vector.load %arg4[%c0_8, %c0_9] : memref<32x1xf32, #tpu.memory_space<vmem>>, vector<32x1xf32>
    %cst_10 = arith.constant dense<0.000000e+00> : vector<8x1xf32>
    %10 = tpu.matmul %8, %9, %cst_10 {dimension_numbers = #tpu.dot_dimension_numbers<[1], [0], [0], [1], [0, 0, 1, 1], [], []>} : vector<8x32xf32>, vector<32x1xf32>, vector<8x1xf32> -> vector<8x1xf32>
    %c0_11 = arith.constant 0 : index
    %c0_12 = arith.constant 0 : index
    %11 = vector.load %arg5[%c0_11, %c0_12] : memref<1x1xf32, #tpu.memory_space<vmem>>, vector<1x1xf32>
    %12 = vector.broadcast %11 : vector<1x1xf32> to vector<8x1xf32>
    %13 = arith.addf %10, %12 : vector<8x1xf32>
    %c0_13 = arith.constant 0 : index
    %c0_14 = arith.constant 0 : index
    %14 = vector.load %arg6[%c0_13, %c0_14] : memref<8x1xf32, #tpu.memory_space<vmem>>, vector<8x1xf32>
    tpu.vector_store %arg6[%c0_13, %c0_14], %13 {strides = array<i32>} : memref<8x1xf32, #tpu.memory_space<vmem>>, vector<8x1xf32>,
    return
  }
  func.func @transform_0(%arg0: i32) -> (i32, i32, i32) {
    %c0_i32 = arith.constant 0 : i32
    %c0_i32_0 = arith.constant 0 : i32
    %c0_i32_1 = arith.constant 0 : i32
    %c0_i32_2 = arith.constant 0 : i32
    return %c0_i32, %c0_i32_0, %c0_i32_1 : i32, i32, i32
  }
  func.func @transform_1(%arg0: i32) -> (i32, i32) {
    %c0_i32 = arith.constant 0 : i32
    %c0_i32_0 = arith.constant 0 : i32
    %c0_i32_1 = arith.constant 0 : i32
    return %c0_i32, %c0_i32_0 : i32, i32
  }
  func.func @transform_2(%arg0: i32) -> (i32, i32) {
    %c0_i32 = arith.constant 0 : i32
    %c0_i32_0 = arith.constant 0 : i32
    %c0_i32_1 = arith.constant 0 : i32
    return %c0_i32, %c0_i32_0 : i32, i32
  }
  func.func @transform_3(%arg0: i32) -> (i32, i32) {
    %c0_i32 = arith.constant 0 : i32
    %c0_i32_0 = arith.constant 0 : i32
    %c0_i32_1 = arith.constant 0 : i32
    return %c0_i32, %c0_i32_0 : i32, i32
  }
  func.func @transform_4(%arg0: i32) -> (i32, i32) {
    %c0_i32 = arith.constant 0 : i32
    %c0_i32_0 = arith.constant 0 : i32
    %c0_i32_1 = arith.constant 0 : i32
    return %c0_i32, %c0_i32_0 : i32, i32
  }
  func.func @transform_5(%arg0: i32) -> (i32, i32) {
    %c0_i32 = arith.constant 0 : i32
    %c0_i32_0 = arith.constant 0 : i32
    %c0_i32_1 = arith.constant 0 : i32
    return %c0_i32, %c0_i32_0 : i32, i32
  }
}

</mosaic_0001>

<llo_original>
// kernel: mlpnet_forward.3
$region0: #{mlpnet_forward.3}
  #allocation0 [shape = 'u32[]', space=smem, size = 0x4, offset = 0x4, fixed_abs, tag = 'smem constant byte address 0x4 - core index']
  #allocation1 [shape = 'u32[144,128]{1,0:T(1,128)}', space=vmem, size = 0x12000, scoped, tag = 'internal scratch']
  #allocation2 [shape = 'f32[1,1]{1,0:T(1,128)S(1)}', space=vmem, size = 0x200, scoped, tag = 'scoped memory for mlpnet_forward.3']
  %s0 = inlined_call_operand.vmem [shape: f32[2,8,64], index: 0, kind: input, shape index: {}]
  %s1 = inlined_call_operand.vmem [shape: f32[64,32], index: 1, kind: input, shape index: {}]
  %s2 = inlined_call_operand.vmem [shape: f32[1,32], index: 2, kind: input, shape index: {}]
  %s3 = inlined_call_operand.vmem [shape: f32[32,1], index: 3, kind: input, shape index: {}]
  %s4 = inlined_call_operand.<no memory space> [shape: f32[1,1], index: 4, kind: input, shape index: {}]
  %s5 = inlined_call_operand.vmem [shape: f32[8,1], index: 5, kind: output, shape index: {}]
  %s6 = sld [smem:[#allocation0]]
  $region30: #{mlpnet_forward.3} parent=0
    _
  %s8 = ssub.s32 1, %s6
  %s9 = scalar_select 0, %s8, %s6
  %v10 = vstv %s4
  %11 = vst [vmem:[#allocation2] sm:$0x1] %v10
  // Predicated region
  $region2: #{mlpnet_forward.3} parent=0 // pred_check
    _
  $region3: #{mlpnet_forward.3} parent=0 // pred_check_branch
    %13 = sbr.rel (0) target = $region5
  $region4: #{mlpnet_forward.3} parent=0 // pred_region
    _
  $region5: #{mlpnet_forward.3} parent=0 // pred_fallthru
    _
  // Predicated region
  $region6: #{mlpnet_forward.3} parent=0 // pred_check
    _
  $region7: #{mlpnet_forward.3} parent=0 // pred_check_branch
    %15 = sbr.rel (0) target = $region9
  $region8: #{mlpnet_forward.3} parent=0 // pred_region
    _
  $region9: #{mlpnet_forward.3} parent=0 // pred_fallthru
    _
  // Predicated region
  $region10: #{mlpnet_forward.3} parent=0 // pred_check
    _
  $region11: #{mlpnet_forward.3} parent=0 // pred_check_branch
    %17 = sbr.rel (0) target = $region13
  $region12: #{mlpnet_forward.3} parent=0 // pred_region
    _
  $region13: #{mlpnet_forward.3} parent=0 // pred_fallthru
    _
  // Predicated region
  $region14: #{mlpnet_forward.3} parent=0 // pred_check
    _
  $region15: #{mlpnet_forward.3} parent=0 // pred_check_branch
    %19 = sbr.rel (0) target = $region17
  $region16: #{mlpnet_forward.3} parent=0 // pred_region
    _
  $region17: #{mlpnet_forward.3} parent=0 // pred_fallthru
    _
  // Predicated region
  $region18: #{mlpnet_forward.3} parent=0 // pred_check
    _
  $region19: #{mlpnet_forward.3} parent=0 // pred_check_branch
    %21 = sbr.rel (0) target = $region21
  $region20: #{mlpnet_forward.3} parent=0 // pred_region
    _
  $region21: #{mlpnet_forward.3} parent=0 // pred_fallthru
    _
  %v22 = vld [vmem:[%s0] sm:$0xff]
  %v23 = vld [vmem:[%s0 + $0x8] sm:$0xff]
  %vm24 = vcmask 523264
  %v25 = vsel %vm24, %v22, 0.0
  %v26 = vsel %vm24, %v23, 0.0
  %v27 = vadd.f32 %v25, %v26
  %v28 = vld [vmem:[%s1] sm:$0xff]
  %v29 = vld [vmem:[%s1 + $0x8] sm:$0xff]
  %v30 = vld [vmem:[%s1 + $0x10] sm:$0xff]
  %v31 = vld [vmem:[%s1 + $0x18] sm:$0xff]
  %v32 = vld [vmem:[%s1 + $0x20] sm:$0xff]
  %v33 = vld [vmem:[%s1 + $0x28] sm:$0xff]
  %v34 = vld [vmem:[%s1 + $0x30] sm:$0xff]
  %v35 = vld [vmem:[%s1 + $0x38] sm:$0xff]
  %v36 = vld [vmem:[%s2] sm:$0x1]
  %v38 = vlaneseq
  %v39 = vshrl.u32 %v38, 7
  %v40 = vsub.s32 0, %v39
  %v41 = vrot.slane %v36, %v40
  %v44 = vsel %vm24, %v27, 0
  %46 = vmatprep.subr.mxu0 0.0
  %47 = vmatpush1.msra.mxu0 %v28
  %48 = vmatprep.subr.mxu0 0.0
  %49 = vmatpush1.msra.mxu0 %v29
  %50 = vmatprep.subr.mxu0 0.0
  %51 = vmatpush1.msra.mxu0 %v30
  %52 = vmatprep.subr.mxu0 0.0
  %53 = vmatpush1.msra.mxu0 %v31
  %54 = vmatprep.subr.mxu0 0.0
  %55 = vmatpush1.msra.mxu0 %v32
  %56 = vmatprep.subr.mxu0 0.0
  %57 = vmatpush1.msra.mxu0 %v33
  %58 = vmatprep.subr.mxu0 0.0
  %59 = vmatpush1.msra.mxu0 %v34
  %60 = vmatprep.subr.mxu0 0.0
  %61 = vmatpush1.msra.mxu0 %v35
  %62 = vmatprep.subr.mxu0 0.0
  %63 = vmatpush1.msra.mxu0 0.0
  %64 = vmatprep.subr.mxu0 0.0
  %65 = vmatpush1.msra.mxu0 0.0
  %66 = vmatprep.subr.mxu0 0.0
  %67 = vmatpush1.msra.mxu0 0.0
  %68 = vmatprep.subr.mxu0 0.0
  %69 = vmatpush1.msra.mxu0 0.0
  %70 = vmatprep.subr.mxu0 0.0
  %71 = vmatpush1.msra.mxu0 0.0
  %72 = vmatprep.subr.mxu0 0.0
  %73 = vmatpush1.msra.mxu0 0.0
  %74 = vmatprep.subr.mxu0 0.0
  %75 = vmatpush1.msra.mxu0 0.0
  %76 = vmatprep.subr.mxu0 0.0
  %77 = vmatpush1.msra.mxu0 0.0
  %78 = vmatprep.subr.mxu0 0.0
  %79 = vmatpush1.msra.mxu0 0.0
  %80 = vmatprep.subr.mxu0 0.0
  %81 = vmatpush1.msra.mxu0 0.0
  %82 = vmatprep.subr.mxu0 0.0
  %83 = vmatpush1.msra.mxu0 0.0
  %84 = vmatprep.subr.mxu0 0.0
  %85 = vmatpush1.msra.mxu0 0.0
  %86 = vmatprep.subr.mxu0 0.0
  %87 = vmatpush1.msra.mxu0 0.0
  %88 = vmatprep.subr.mxu0 0.0
  %89 = vmatpush1.msra.mxu0 0.0
  %90 = vmatprep.subr.mxu0 0.0
  %91 = vmatpush1.msra.mxu0 0.0
  %92 = vmatprep.subr.mxu0 0.0
  %93 = vmatpush1.msra.mxu0 0.0
  %94 = vmatprep.subr.mxu0 0.0
  %95 = vmatpush1.msra.mxu0 0.0
  %96 = vmatprep.subr.mxu0 0.0
  %97 = vmatpush1.msra.mxu0 0.0
  %98 = vmatprep.subr.mxu0 0.0
  %99 = vmatpush1.msra.mxu0 0.0
  %100 = vmatprep.subr.mxu0 0.0
  %101 = vmatpush1.msra.mxu0 0.0
  %102 = vmatprep.subr.mxu0 0.0
  %103 = vmatpush1.msra.mxu0 0.0
  %104 = vmatprep.subr.mxu0 0.0
  %105 = vmatpush1.msra.mxu0 0.0
  %106 = vmatprep.subr.mxu0 0.0
  %107 = vmatpush1.msra.mxu0 0.0
  %108 = vmatprep.subr.mxu0 0.0
  %109 = vmatpush1.msra.mxu0 0.0
  %110 = vmatprep.mubr.f32.mxu0 0.0
  %111 = vmatmul.mubr.f32.gmra.mrb[0].mxu0 %v44
  %v112 = vpop.f32.mrb[0].mxu0
  %v113 = vadd.f32 %v41, %v112
  %v114 = vpop.f32.mrb[0].mxu0
  %115 = vdwg.mxu0
  %v116 = vmax.f32 %v113, 0.0
  %v117 = vld [vmem:[%s3] sm:$0xff]
  %v118 = vld [vmem:[%s3 + $0x8] sm:$0xff]
  %v119 = vld [vmem:[%s3 + $0x10] sm:$0xff]
  %v120 = vld [vmem:[%s3 + $0x18] sm:$0xff]
  %v121 = vld [vmem:[#allocation2] sm:$0x1]
  %v123 = vlaneseq
  %v124 = vshrl.u32 %v123, 7
  %v125 = vsub.s32 0, %v124
  %v126 = vrot.slane %v121, %v125
  %vm128 = vcmask 261120
  %v130 = vsel %vm128, %v116, 0
  %132 = vmatprep.subr.mxu0 0.0
  %133 = vmatpush1.msra.mxu0 %v117
  %134 = vmatprep.subr.mxu0 0.0
  %135 = vmatpush1.msra.mxu0 %v118
  %136 = vmatprep.subr.mxu0 0.0
  %137 = vmatpush1.msra.mxu0 %v119
  %138 = vmatprep.subr.mxu0 0.0
  %139 = vmatpush1.msra.mxu0 %v120
  %140 = vmatprep.subr.mxu0 0.0
  %141 = vmatpush1.msra.mxu0 0.0
  %142 = vmatprep.subr.mxu0 0.0
  %143 = vmatpush1.msra.mxu0 0.0
  %144 = vmatprep.subr.mxu0 0.0
  %145 = vmatpush1.msra.mxu0 0.0
  %146 = vmatprep.subr.mxu0 0.0
  %147 = vmatpush1.msra.mxu0 0.0
  %148 = vmatprep.subr.mxu0 0.0
  %149 = vmatpush1.msra.mxu0 0.0
  %150 = vmatprep.subr.mxu0 0.0
  %151 = vmatpush1.msra.mxu0 0.0
  %152 = vmatprep.subr.mxu0 0.0
  %153 = vmatpush1.msra.mxu0 0.0
  %154 = vmatprep.subr.mxu0 0.0
  %155 = vmatpush1.msra.mxu0 0.0
  %156 = vmatprep.subr.mxu0 0.0
  %157 = vmatpush1.msra.mxu0 0.0
  %158 = vmatprep.subr.mxu0 0.0
  %159 = vmatpush1.msra.mxu0 0.0
  %160 = vmatprep.subr.mxu0 0.0
  %161 = vmatpush1.msra.mxu0 0.0
  %162 = vmatprep.subr.mxu0 0.0
  %163 = vmatpush1.msra.mxu0 0.0
  %164 = vmatprep.subr.mxu0 0.0
  %165 = vmatpush1.msra.mxu0 0.0
  %166 = vmatprep.subr.mxu0 0.0
  %167 = vmatpush1.msra.mxu0 0.0
  %168 = vmatprep.subr.mxu0 0.0
  %169 = vmatpush1.msra.mxu0 0.0
  %170 = vmatprep.subr.mxu0 0.0
  %171 = vmatpush1.msra.mxu0 0.0
  %172 = vmatprep.subr.mxu0 0.0
  %173 = vmatpush1.msra.mxu0 0.0
  %174 = vmatprep.subr.mxu0 0.0
  %175 = vmatpush1.msra.mxu0 0.0
  %176 = vmatprep.subr.mxu0 0.0
  %177 = vmatpush1.msra.mxu0 0.0
  %178 = vmatprep.subr.mxu0 0.0
  %179 = vmatpush1.msra.mxu0 0.0
  %180 = vmatprep.subr.mxu0 0.0
  %181 = vmatpush1.msra.mxu0 0.0
  %182 = vmatprep.subr.mxu0 0.0
  %183 = vmatpush1.msra.mxu0 0.0
  %184 = vmatprep.subr.mxu0 0.0
  %185 = vmatpush1.msra.mxu0 0.0
  %186 = vmatprep.subr.mxu0 0.0
  %187 = vmatpush1.msra.mxu0 0.0
  %188 = vmatprep.subr.mxu0 0.0
  %189 = vmatpush1.msra.mxu0 0.0
  %190 = vmatprep.subr.mxu0 0.0
  %191 = vmatpush1.msra.mxu0 0.0
  %192 = vmatprep.subr.mxu0 0.0
  %193 = vmatpush1.msra.mxu0 0.0
  %194 = vmatprep.subr.mxu0 0.0
  %195 = vmatpush1.msra.mxu0 0.0
  %196 = vmatprep.mubr.f32.mxu0 0.0
  %197 = vmatmul.mubr.f32.gmra.mrb[0].mxu0 %v130
  %v198 = vpop.f32.mrb[0].mxu0
  %v199 = vadd.f32 %v126, %v198
  %v200 = vpop.f32.mrb[0].mxu0
  %201 = vdwg.mxu0
  %vm202 = vcmask 7168
  %203 = vst.msk [vmem:[%s5] sm:$0xff] %vm202, %v199
  // Predicated region
  $region22: #{mlpnet_forward.3} parent=0 // pred_check
    _
  $region23: #{mlpnet_forward.3} parent=0 // pred_check_branch
    %205 = sbr.rel (0) target = $region25
  $region24: #{mlpnet_forward.3} parent=0 // pred_region
    _
  $region25: #{mlpnet_forward.3} parent=0 // pred_fallthru
    _
  // Predicated region
  $region26: #{mlpnet_forward.3} parent=0 // pred_check
    _
  $region27: #{mlpnet_forward.3} parent=0 // pred_check_branch
    %207 = sbr.rel (0) target = $region29
  $region28: #{mlpnet_forward.3} parent=0 // pred_region
    _
  $region29: #{mlpnet_forward.3} parent=0 // pred_fallthru
    _

// kernel: mlpnet_forward.2
$region0: #{mlpnet_forward.2}
  #allocation0 [shape = 'u32[]', space=smem, size = 0x4, offset = 0x4, fixed_abs, tag = 'smem constant byte address 0x4 - core index']
  #allocation1 [shape = 'u32[144,128]{1,0:T(1,128)}', space=vmem, size = 0x12000, scoped, tag = 'internal scratch']
  #allocation2 [shape = 'f32[8,64]{1,0:T(8,128)}', space=vmem, size = 0x1000, scoped, tag = 'scratch operand']
  %s0 = inlined_call_operand.vmem [shape: s32[1,1024], index: 0, kind: input, shape index: {}]
  %s1 = inlined_call_operand.vmem [shape: f32[1,1024], index: 1, kind: input, shape index: {}]
  %s2 = inlined_call_operand.vmem [shape: f32[1024,4], index: 2, kind: input, shape index: {}]
  %s3 = inlined_call_operand.vmem [shape: f32[4,32], index: 3, kind: input, shape index: {}]
  %s4 = inlined_call_operand.vmem [shape: f32[1,32], index: 4, kind: input, shape index: {}]
  %s5 = inlined_call_operand.vmem [shape: f32[32,64], index: 5, kind: input, shape index: {}]
  %s6 = inlined_call_operand.vmem [shape: f32[1,64], index: 6, kind: input, shape index: {}]
  %s7 = inlined_call_operand.vmem [shape: f32[64,64], index: 7, kind: input, shape index: {}]
  %s8 = inlined_call_operand.vmem [shape: f32[1,64], index: 8, kind: input, shape index: {}]
  %s9 = inlined_call_operand.vmem [shape: f32[2,8,64], index: 9, kind: output, shape index: {}]
  %s10 = sld [smem:[#allocation0]]
  $region77: #{mlpnet_forward.2} parent=0
    _
  %s12 = ssub.s32 1, %s10
  %s13 = scalar_select 0, %s12, %s10
  loop: start=0, step=1, limit=4
  $region2: #{mlpnet_forward.2} parent=0 // loop_pre_header
    _
  $region3: #{mlpnet_forward.2} parent=0 // loop_header
    %s15 = sphi 0, %s19
    %p16 = scmp.ge.s32.totalorder %s15, 4
    %s22 = sphi 0, %s34
    %s23 = sphi 0, %s30
    %s24 = sphi 0, %s22
    %s25 = sphi 0, %s23
    %s26 = sphi 0, %s24
    %s27 = sphi 0, %s25
    %s39 = sphi 0, %s41
    %s42 = sphi 0, %s39
    %s43 = sphi 0, %s42
    %s59 = sphi 0, %s43
    %s67 = sphi 0, %s69
    %s70 = sphi 0, %s67
    %s71 = sphi 0, %s70
    %s87 = sphi 0, %s71
    %s95 = sphi 0, %s97
    %s98 = sphi 0, %s95
    %s99 = sphi 0, %s98
    %s115 = sphi 0, %s99
    %s119 = sphi 0, %s119
    %s121 = sphi 0, %s119
    %s122 = sphi 0, %s121
    %s136 = sphi 0, %s122
    %s140 = sphi 0, %s140
    %s142 = sphi 0, %s140
    %s143 = sphi 0, %s142
    %s157 = sphi 0, %s143
    %s161 = sphi 0, %s161
    %s163 = sphi 0, %s161
    %s164 = sphi 0, %s163
    %s178 = sphi 0, %s164
    %s182 = sphi 0, %s182
    %s184 = sphi 0, %s182
    %s185 = sphi 0, %s184
    %s199 = sphi 0, %s185
    %s203 = sphi 0, %s203
    %s205 = sphi 0, %s203
    %s206 = sphi 0, %s205
    %s220 = sphi 0, %s206
    %s224 = sphi 0, %s224
    %s226 = sphi 0, %s224
    %s227 = sphi 0, %s226
    %s241 = sphi 0, %s227
    %s247 = sphi 0, %s249
    %s250 = sphi 0, %s247
    %s251 = sphi 0, %s250
    %s267 = sphi 0, %s251
  $region4: #{mlpnet_forward.2} parent=0 // loop_header_branch
    %18 = sbr.rel (%p16) target = $region8
  $region5: #{mlpnet_forward.2} parent=0 // loop_body
    %s20 = ssub.s32 %s15, 1
    %s21 = ssub.s32 %s15, 2
    %s28 = sadd.s32 1, %s23
    %p29 = scmp.ge.s32.totalorder %s28, 1
    %s30 = scalar_select %p29, 0, %s28
    %s31 = sadd.s32 1, %s22
    %s32 = scalar_select %p29, %s31, %s22
    %p33 = scmp.ge.s32.totalorder %s32, 2
    %s34 = scalar_select %p33, 0, %s32
    %s35 = sadd.s32 %s22, %s23
    %s36 = sadd.s32 %s34, %s30
    %s37 = ssub.s32 %s35, %s36
    %p38 = scmp.eq.s32.totalorder %s37, 0
    %s40 = sadd.s32 %s39, 1
    %s41 = scalar_select %p38, %s39, %s40
    %p44 = pneg %p38
    %p45 = scmp.eq.s32.totalorder %s15, 1
    %p46 = por %p44, %p45
    %p47 = scmp.ne.s32.totalorder %s39, %s42
    %p48 = scmp.eq.s32.totalorder %s15, 0
    %p49 = por %p47, %p48
    %p50 = scmp.ne.s32.totalorder %s39, %s42
    %p51 = scmp.eq.s32.totalorder %s20, 1
    %p52 = por %p50, %p51
    %p53 = scmp.ne.s32.totalorder %s42, %s43
    %p54 = scmp.eq.s32.totalorder %s20, 0
    %p55 = por %p53, %p54
    %p56 = scmp.ne.s32.totalorder %s42, %s43
    %p57 = scmp.eq.s32.totalorder %s21, 1
    %p58 = por %p56, %p57
    %p60 = scmp.ne.s32.totalorder %s43, %s59
    %p61 = scmp.eq.s32.totalorder %s21, 0
    %p62 = por %p60, %p61
    %s63 = sadd.s32 %s22, %s23
    %s64 = sadd.s32 %s34, %s30
    %s65 = ssub.s32 %s63, %s64
    %p66 = scmp.eq.s32.totalorder %s65, 0
    %s68 = sadd.s32 %s67, 1
    %s69 = scalar_select %p66, %s67, %s68
    %p72 = pneg %p66
    %p73 = scmp.eq.s32.totalorder %s15, 1
    %p74 = por %p72, %p73
    %p75 = scmp.ne.s32.totalorder %s67, %s70
    %p76 = scmp.eq.s32.totalorder %s15, 0
    %p77 = por %p75, %p76
    %p78 = scmp.ne.s32.totalorder %s67, %s70
    %p79 = scmp.eq.s32.totalorder %s20, 1
    %p80 = por %p78, %p79
    %p81 = scmp.ne.s32.totalorder %s70, %s71
    %p82 = scmp.eq.s32.totalorder %s20, 0
    %p83 = por %p81, %p82
    %p84 = scmp.ne.s32.totalorder %s70, %s71
    %p85 = scmp.eq.s32.totalorder %s21, 1
    %p86 = por %p84, %p85
    %p88 = scmp.ne.s32.totalorder %s71, %s87
    %p89 = scmp.eq.s32.totalorder %s21, 0
    %p90 = por %p88, %p89
    %s91 = sadd.s32 %s22, %s23
    %s92 = sadd.s32 %s34, %s30
    %s93 = ssub.s32 %s91, %s92
    %p94 = scmp.eq.s32.totalorder %s93, 0
    %s96 = sadd.s32 %s95, 1
    %s97 = scalar_select %p94, %s95, %s96
    %p100 = pneg %p94
    %p101 = scmp.eq.s32.totalorder %s15, 1
    %p102 = por %p100, %p101
    %p103 = scmp.ne.s32.totalorder %s95, %s98
    %p104 = scmp.eq.s32.totalorder %s15, 0
    %p105 = por %p103, %p104
    %p106 = scmp.ne.s32.totalorder %s95, %s98
    %p107 = scmp.eq.s32.totalorder %s20, 1
    %p108 = por %p106, %p107
    %p109 = scmp.ne.s32.totalorder %s98, %s99
    %p110 = scmp.eq.s32.totalorder %s20, 0
    %p111 = por %p109, %p110
    %p112 = scmp.ne.s32.totalorder %s98, %s99
    %p113 = scmp.eq.s32.totalorder %s21, 1
    %p114 = por %p112, %p113
    %p116 = scmp.ne.s32.totalorder %s99, %s115
    %p117 = scmp.eq.s32.totalorder %s21, 0
    %p118 = por %p116, %p117
    %s120 = sadd.s32 %s119, 1
    %p123 = scmp.eq.s32.totalorder %s15, 1
    %p124 = scmp.ne.s32.totalorder %s119, %s121
    %p125 = scmp.eq.s32.totalorder %s15, 0
    %p126 = por %p124, %p125
    %p127 = scmp.ne.s32.totalorder %s119, %s121
    %p128 = scmp.eq.s32.totalorder %s20, 1
    %p129 = por %p127, %p128
    %p130 = scmp.ne.s32.totalorder %s121, %s122
    %p131 = scmp.eq.s32.totalorder %s20, 0
    %p132 = por %p130, %p131
    %p133 = scmp.ne.s32.totalorder %s121, %s122
    %p134 = scmp.eq.s32.totalorder %s21, 1
    %p135 = por %p133, %p134
    %p137 = scmp.ne.s32.totalorder %s122, %s136
    %p138 = scmp.eq.s32.totalorder %s21, 0
    %p139 = por %p137, %p138
    %s141 = sadd.s32 %s140, 1
    %p144 = scmp.eq.s32.totalorder %s15, 1
    %p145 = scmp.ne.s32.totalorder %s140, %s142
    %p146 = scmp.eq.s32.totalorder %s15, 0
    %p147 = por %p145, %p146
    %p148 = scmp.ne.s32.totalorder %s140, %s142
    %p149 = scmp.eq.s32.totalorder %s20, 1
    %p150 = por %p148, %p149
    %p151 = scmp.ne.s32.totalorder %s142, %s143
    %p152 = scmp.eq.s32.totalorder %s20, 0
    %p153 = por %p151, %p152
    %p154 = scmp.ne.s32.totalorder %s142, %s143
    %p155 = scmp.eq.s32.totalorder %s21, 1
    %p156 = por %p154, %p155
    %p158 = scmp.ne.s32.totalorder %s143, %s157
    %p159 = scmp.eq.s32.totalorder %s21, 0
    %p160 = por %p158, %p159
    %s162 = sadd.s32 %s161, 1
    %p165 = scmp.eq.s32.totalorder %s15, 1
    %p166 = scmp.ne.s32.totalorder %s161, %s163
    %p167 = scmp.eq.s32.totalorder %s15, 0
    %p168 = por %p166, %p167
    %p169 = scmp.ne.s32.totalorder %s161, %s163
    %p170 = scmp.eq.s32.totalorder %s20, 1
    %p171 = por %p169, %p170
    %p172 = scmp.ne.s32.totalorder %s163, %s164
    %p173 = scmp.eq.s32.totalorder %s20, 0
    %p174 = por %p172, %p173
    %p175 = scmp.ne.s32.totalorder %s163, %s164
    %p176 = scmp.eq.s32.totalorder %s21, 1
    %p177 = por %p175, %p176
    %p179 = scmp.ne.s32.totalorder %s164, %s178
    %p180 = scmp.eq.s32.totalorder %s21, 0
    %p181 = por %p179, %p180
    %s183 = sadd.s32 %s182, 1
    %p186 = scmp.eq.s32.totalorder %s15, 1
    %p187 = scmp.ne.s32.totalorder %s182, %s184
    %p188 = scmp.eq.s32.totalorder %s15, 0
    %p189 = por %p187, %p188
    %p190 = scmp.ne.s32.totalorder %s182, %s184
    %p191 = scmp.eq.s32.totalorder %s20, 1
    %p192 = por %p190, %p191
    %p193 = scmp.ne.s32.totalorder %s184, %s185
    %p194 = scmp.eq.s32.totalorder %s20, 0
    %p195 = por %p193, %p194
    %p196 = scmp.ne.s32.totalorder %s184, %s185
    %p197 = scmp.eq.s32.totalorder %s21, 1
    %p198 = por %p196, %p197
    %p200 = scmp.ne.s32.totalorder %s185, %s199
    %p201 = scmp.eq.s32.totalorder %s21, 0
    %p202 = por %p200, %p201
    %s204 = sadd.s32 %s203, 1
    %p207 = scmp.eq.s32.totalorder %s15, 1
    %p208 = scmp.ne.s32.totalorder %s203, %s205
    %p209 = scmp.eq.s32.totalorder %s15, 0
    %p210 = por %p208, %p209
    %p211 = scmp.ne.s32.totalorder %s203, %s205
    %p212 = scmp.eq.s32.totalorder %s20, 1
    %p213 = por %p211, %p212
    %p214 = scmp.ne.s32.totalorder %s205, %s206
    %p215 = scmp.eq.s32.totalorder %s20, 0
    %p216 = por %p214, %p215
    %p217 = scmp.ne.s32.totalorder %s205, %s206
    %p218 = scmp.eq.s32.totalorder %s21, 1
    %p219 = por %p217, %p218
    %p221 = scmp.ne.s32.totalorder %s206, %s220
    %p222 = scmp.eq.s32.totalorder %s21, 0
    %p223 = por %p221, %p222
    %s225 = sadd.s32 %s224, 1
    %p228 = scmp.eq.s32.totalorder %s15, 1
    %p229 = scmp.ne.s32.totalorder %s224, %s226
    %p230 = scmp.eq.s32.totalorder %s15, 0
    %p231 = por %p229, %p230
    %p232 = scmp.ne.s32.totalorder %s224, %s226
    %p233 = scmp.eq.s32.totalorder %s20, 1
    %p234 = por %p232, %p233
    %p235 = scmp.ne.s32.totalorder %s226, %s227
    %p236 = scmp.eq.s32.totalorder %s20, 0
    %p237 = por %p235, %p236
    %p238 = scmp.ne.s32.totalorder %s226, %s227
    %p239 = scmp.eq.s32.totalorder %s21, 1
    %p240 = por %p238, %p239
    %p242 = scmp.ne.s32.totalorder %s227, %s241
    %p243 = scmp.eq.s32.totalorder %s21, 0
    %p244 = por %p242, %p243
    %s245 = ssub.s32 %s22, %s34
    %p246 = scmp.eq.s32.totalorder %s245, 0
    %s248 = sadd.s32 %s247, 1
    %s249 = scalar_select %p246, %s247, %s248
    %p252 = pneg %p246
    %p253 = scmp.eq.s32.totalorder %s15, 1
    %p254 = por %p252, %p253
    %p255 = scmp.ne.s32.totalorder %s247, %s250
    %p256 = scmp.eq.s32.totalorder %s15, 0
    %p257 = por %p255, %p256
    %p258 = scmp.ne.s32.totalorder %s247, %s250
    %p259 = scmp.eq.s32.totalorder %s20, 1
    %p260 = por %p258, %p259
    %p261 = scmp.ne.s32.totalorder %s250, %s251
    %p262 = scmp.eq.s32.totalorder %s20, 0
    %p263 = por %p261, %p262
    %p264 = scmp.ne.s32.totalorder %s250, %s251
    %p265 = scmp.eq.s32.totalorder %s21, 1
    %p266 = por %p264, %p265
    %p268 = scmp.ne.s32.totalorder %s251, %s267
    %p269 = scmp.eq.s32.totalorder %s21, 0
    %p270 = por %p268, %p269
    %p271 = scmp.le.s32.totalorder 1, %s15
    %p272 = scmp.lt.s32.totalorder %s15, 3
    %p273 = pnand %p271, %p272
    %p274 = pneg %p273
    // Predicated region
    $region9: #{mlpnet_forward.2} parent=5 // pred_check
      _
    $region10: #{mlpnet_forward.2} parent=5 // pred_check_branch
      %276 = sbr.rel (%p273) target = $region12
    $region11: #{mlpnet_forward.2} parent=5 // pred_region
      %s277 = ssub.s32 %s15, 1
      // Predicated region
      $region13: #{mlpnet_forward.2} parent=11 // pred_check
        %p278 = pneg %p132
      $region14: #{mlpnet_forward.2} parent=11 // pred_check_branch
        %280 = sbr.rel (%p278) target = $region16
      $region15: #{mlpnet_forward.2} parent=11 // pred_region
        _
      $region16: #{mlpnet_forward.2} parent=11 // pred_fallthru
        _
      // Predicated region
      $region17: #{mlpnet_forward.2} parent=11 // pred_check
        %p281 = pneg %p153
      $region18: #{mlpnet_forward.2} parent=11 // pred_check_branch
        %283 = sbr.rel (%p281) target = $region20
      $region19: #{mlpnet_forward.2} parent=11 // pred_region
        _
      $region20: #{mlpnet_forward.2} parent=11 // pred_fallthru
        _
      // Predicated region
      $region21: #{mlpnet_forward.2} parent=11 // pred_check
        %p284 = pneg %p174
      $region22: #{mlpnet_forward.2} parent=11 // pred_check_branch
        %286 = sbr.rel (%p284) target = $region24
      $region23: #{mlpnet_forward.2} parent=11 // pred_region
        _
      $region24: #{mlpnet_forward.2} parent=11 // pred_fallthru
        _
      // Predicated region
      $region25: #{mlpnet_forward.2} parent=11 // pred_check
        %p287 = pneg %p195
      $region26: #{mlpnet_forward.2} parent=11 // pred_check_branch
        %289 = sbr.rel (%p287) target = $region28
      $region27: #{mlpnet_forward.2} parent=11 // pred_region
        _
      $region28: #{mlpnet_forward.2} parent=11 // pred_fallthru
        _
      // Predicated region
      $region29: #{mlpnet_forward.2} parent=11 // pred_check
        %p290 = pneg %p216
      $region30: #{mlpnet_forward.2} parent=11 // pred_check_branch
        %292 = sbr.rel (%p290) target = $region32
      $region31: #{mlpnet_forward.2} parent=11 // pred_region
        _
      $region32: #{mlpnet_forward.2} parent=11 // pred_fallthru
        _
      // Predicated region
      $region33: #{mlpnet_forward.2} parent=11 // pred_check
        %p293 = pneg %p237
      $region34: #{mlpnet_forward.2} parent=11 // pred_check_branch
        %295 = sbr.rel (%p293) target = $region36
      $region35: #{mlpnet_forward.2} parent=11 // pred_region
        _
      $region36: #{mlpnet_forward.2} parent=11 // pred_fallthru
        _
    $region12: #{mlpnet_forward.2} parent=5 // pred_fallthru
      _
    %p296 = scmp.lt.s32.totalorder %s15, 2
    // Predicated region
    $region37: #{mlpnet_forward.2} parent=5 // pred_check
      %p297 = pneg %p296
    $region38: #{mlpnet_forward.2} parent=5 // pred_check_branch
      %299 = sbr.rel (%p297) target = $region40
    $region39: #{mlpnet_forward.2} parent=5 // pred_region
      // Predicated region
      $region41: #{mlpnet_forward.2} parent=39 // pred_check
        %p300 = pneg %p49
      $region42: #{mlpnet_forward.2} parent=39 // pred_check_branch
        %302 = sbr.rel (%p300) target = $region44
      $region43: #{mlpnet_forward.2} parent=39 // pred_region
        %s303 = sadd.s32 %s22, %s23
        %s304 = smul.u32 4, %s303
        %p305 = scmp.lt.s32.totalorder %s304, 7
        %s306 = scalar_select %p305, %s304, 7
        %s307 = scalar_lea.vmem %s0, %s306
        %s308 = sadd.s32 %s22, %s23
        %s309 = smul.u32 4, %s308
      $region44: #{mlpnet_forward.2} parent=39 // pred_fallthru
        _
      // Predicated region
      $region45: #{mlpnet_forward.2} parent=39 // pred_check
        %p310 = pneg %p77
      $region46: #{mlpnet_forward.2} parent=39 // pred_check_branch
        %312 = sbr.rel (%p310) target = $region48
      $region47: #{mlpnet_forward.2} parent=39 // pred_region
        %s313 = sadd.s32 %s22, %s23
        %s314 = smul.u32 4, %s313
        %p315 = scmp.lt.s32.totalorder %s314, 7
        %s316 = scalar_select %p315, %s314, 7
        %s317 = scalar_lea.vmem %s1, %s316
        %s318 = sadd.s32 %s22, %s23
        %s319 = smul.u32 4, %s318
      $region48: #{mlpnet_forward.2} parent=39 // pred_fallthru
        _
      // Predicated region
      $region49: #{mlpnet_forward.2} parent=39 // pred_check
        %p320 = pneg %p105
      $region50: #{mlpnet_forward.2} parent=39 // pred_check_branch
        %322 = sbr.rel (%p320) target = $region52
      $region51: #{mlpnet_forward.2} parent=39 // pred_region
        %s323 = sadd.s32 %s22, %s23
        %s324 = smul.u32 64, %s323
        %p325 = scmp.lt.s32.totalorder %s324, 127
        %s326 = scalar_select %p325, %s324, 127
        %s327 = smul.addr %s326, 8
        %s328 = scalar_lea.vmem %s2, %s327
        %s329 = sadd.s32 %s22, %s23
        %s330 = smul.u32 64, %s329
      $region52: #{mlpnet_forward.2} parent=39 // pred_fallthru
        _
    $region40: #{mlpnet_forward.2} parent=5 // pred_fallthru
      _
    %p331 = scmp.le.s32.totalorder 1, %s15
    %p332 = scmp.lt.s32.totalorder %s15, 3
    %p333 = pnand %p331, %p332
    %p334 = pneg %p333
    // Predicated region
    $region53: #{mlpnet_forward.2} parent=5 // pred_check
      _
    $region54: #{mlpnet_forward.2} parent=5 // pred_check_branch
      %336 = sbr.rel (%p333) target = $region56
    $region55: #{mlpnet_forward.2} parent=5 // pred_region
      %s337 = ssub.s32 %s15, 1
      %s338 = sadd.s32 %s24, %s25
      %s339 = smul.u32 4, %s338
      %p340 = scmp.lt.s32.totalorder %s339, 7
      %s341 = scalar_select %p340, %s339, 7
      %s342 = scalar_lea.vmem %s0, %s341
      %p343 = pneg %p55
      %p344 = pneg %p52
      %s345 = sadd.s32 %s24, %s25
      %s346 = smul.u32 4, %s345
      %p347 = scmp.lt.s32.totalorder %s346, 7
      %s348 = scalar_select %p347, %s346, 7
      %s349 = scalar_lea.vmem %s1, %s348
      %p350 = pneg %p83
      %p351 = pneg %p80
      %s352 = sadd.s32 %s24, %s25
      %s353 = smul.u32 64, %s352
      %p354 = scmp.lt.s32.totalorder %s353, 127
      %s355 = scalar_select %p354, %s353, 127
      %s356 = smul.addr %s355, 8
      %s357 = scalar_lea.vmem %s2, %s356
      %p358 = pneg %p111
      %p359 = pneg %p108
      %p360 = pneg %p132
      %p361 = pneg %p129
      %p362 = pneg %p153
      %p363 = pneg %p150
      %p364 = pneg %p174
      %p365 = pneg %p171
      %p366 = pneg %p195
      %p367 = pneg %p192
      %p368 = pneg %p216
      %p369 = pneg %p213
      %p370 = pneg %p237
      %p371 = pneg %p234
      %p372 = pneg %p263
      %p373 = pneg %p260
      %p374 = scmp.lt.s32.totalorder %s24, 1
      %s375 = scalar_select %p374, %s24, 1
      %s376 = smul.addr %s375, 8
      %s377 = scalar_lea.vmem %s9, %s376
      %s378 = sadd.s32 %s24, %s25
      %s379 = smul.u32 4, %s378
      %p380 = scmp.lt.s32.totalorder %s379, 7
      %s381 = scalar_select %p380, %s379, 7
      %s382 = scalar_lea.vmem %s0, %s381
      %s383 = sadd.s32 %s24, %s25
      %s384 = smul.u32 4, %s383
      %s385 = sadd.s32 %s24, %s25
      %s386 = smul.u32 4, %s385
      %p387 = scmp.lt.s32.totalorder %s386, 7
      %s388 = scalar_select %p387, %s386, 7
      %s389 = scalar_lea.vmem %s1, %s388
      %s390 = sadd.s32 %s24, %s25
      %s391 = smul.u32 4, %s390
      %s392 = sadd.s32 %s24, %s25
      %s393 = smul.u32 64, %s392
      %p394 = scmp.lt.s32.totalorder %s393, 127
      %s395 = scalar_select %p394, %s393, 127
      %s396 = smul.addr %s395, 8
      %s397 = scalar_lea.vmem %s2, %s396
      %s398 = sadd.s32 %s24, %s25
      %s399 = smul.u32 64, %s398
      %p400 = scmp.lt.s32.totalorder %s24, 1
      %s401 = scalar_select %p400, %s24, 1
      %s402 = smul.addr %s401, 8
      %s403 = scalar_lea.vmem %s9, %s402
      %p404 = scmp.eq.s32.totalorder %s25, 0
      // Predicated region
      $region57: #{mlpnet_forward.2} parent=55 // pred_check
        %p405 = pneg %p404
      $region58: #{mlpnet_forward.2} parent=55 // pred_check_branch
        %407 = sbr.rel (%p405) target = $region60
      $region59: #{mlpnet_forward.2} parent=55 // pred_region
        %vm408 = vcmask 523264
        %409 = vst.msk [vmem:[#allocation2] sm:$0xff] %vm408, 0.0
      $region60: #{mlpnet_forward.2} parent=55 // pred_fallthru
        _
      %v410 = vld [vmem:[%s397] sm:$0xff]
      %v411 = vld [vmem:[%s397 + $0x8] sm:$0xff]
      %v412 = vld [vmem:[%s397 + $0x10] sm:$0xff]
      %v413 = vld [vmem:[%s397 + $0x18] sm:$0xff]
      %v414 = vld [vmem:[%s397 + $0x20] sm:$0xff]
      %v415 = vld [vmem:[%s397 + $0x28] sm:$0xff]
      %v416 = vld [vmem:[%s397 + $0x30] sm:$0xff]
      %v417 = vld [vmem:[%s397 + $0x38] sm:$0xff]
      %v418 = vld [vmem:[%s397 + $0x40] sm:$0xff]
      %v419 = vld [vmem:[%s397 + $0x48] sm:$0xff]
      %v420 = vld [vmem:[%s397 + $0x50] sm:$0xff]
      %v421 = vld [vmem:[%s397 + $0x58] sm:$0xff]
      %v422 = vld [vmem:[%s397 + $0x60] sm:$0xff]
      %v423 = vld [vmem:[%s397 + $0x68] sm:$0xff]
      %v424 = vld [vmem:[%s397 + $0x70] sm:$0xff]
      %v425 = vld [vmem:[%s397 + $0x78] sm:$0xff]
      %v426 = vld [vmem:[%s397 + $0x80] sm:$0xff]
      %v427 = vld [vmem:[%s397 + $0x88] sm:$0xff]
      %v428 = vld [vmem:[%s397 + $0x90] sm:$0xff]
      %v429 = vld [vmem:[%s397 + $0x98] sm:$0xff]
      %v430 = vld [vmem:[%s397 + $0xa0] sm:$0xff]
      %v431 = vld [vmem:[%s397 + $0xa8] sm:$0xff]
      %v432 = vld [vmem:[%s397 + $0xb0] sm:$0xff]
      %v433 = vld [vmem:[%s397 + $0xb8] sm:$0xff]
      %v434 = vld [vmem:[%s397 + $0xc0] sm:$0xff]
      %v435 = vld [vmem:[%s397 + $0xc8] sm:$0xff]
      %v436 = vld [vmem:[%s397 + $0xd0] sm:$0xff]
      %v437 = vld [vmem:[%s397 + $0xd8] sm:$0xff]
      %v438 = vld [vmem:[%s397 + $0xe0] sm:$0xff]
      %v439 = vld [vmem:[%s397 + $0xe8] sm:$0xff]
      %v440 = vld [vmem:[%s397 + $0xf0] sm:$0xff]
      %v441 = vld [vmem:[%s397 + $0xf8] sm:$0xff]
      %v442 = vld [vmem:[%s397 + $0x100] sm:$0xff]
      %v443 = vld [vmem:[%s397 + $0x108] sm:$0xff]
      %v444 = vld [vmem:[%s397 + $0x110] sm:$0xff]
      %v445 = vld [vmem:[%s397 + $0x118] sm:$0xff]
      %v446 = vld [vmem:[%s397 + $0x120] sm:$0xff]
      %v447 = vld [vmem:[%s397 + $0x128] sm:$0xff]
      %v448 = vld [vmem:[%s397 + $0x130] sm:$0xff]
      %v449 = vld [vmem:[%s397 + $0x138] sm:$0xff]
      %v450 = vld [vmem:[%s397 + $0x140] sm:$0xff]
      %v451 = vld [vmem:[%s397 + $0x148] sm:$0xff]
      %v452 = vld [vmem:[%s397 + $0x150] sm:$0xff]
      %v453 = vld [vmem:[%s397 + $0x158] sm:$0xff]
      %v454 = vld [vmem:[%s397 + $0x160] sm:$0xff]
      %v455 = vld [vmem:[%s397 + $0x168] sm:$0xff]
      %v456 = vld [vmem:[%s397 + $0x170] sm:$0xff]
      %v457 = vld [vmem:[%s397 + $0x178] sm:$0xff]
      %v458 = vld [vmem:[%s397 + $0x180] sm:$0xff]
      %v459 = vld [vmem:[%s397 + $0x188] sm:$0xff]
      %v460 = vld [vmem:[%s397 + $0x190] sm:$0xff]
      %v461 = vld [vmem:[%s397 + $0x198] sm:$0xff]
      %v462 = vld [vmem:[%s397 + $0x1a0] sm:$0xff]
      %v463 = vld [vmem:[%s397 + $0x1a8] sm:$0xff]
      %v464 = vld [vmem:[%s397 + $0x1b0] sm:$0xff]
      %v465 = vld [vmem:[%s397 + $0x1b8] sm:$0xff]
      %v466 = vld [vmem:[%s397 + $0x1c0] sm:$0xff]
      %v467 = vld [vmem:[%s397 + $0x1c8] sm:$0xff]
      %v468 = vld [vmem:[%s397 + $0x1d0] sm:$0xff]
      %v469 = vld [vmem:[%s397 + $0x1d8] sm:$0xff]
      %v470 = vld [vmem:[%s397 + $0x1e0] sm:$0xff]
      %v471 = vld [vmem:[%s397 + $0x1e8] sm:$0xff]
      %v472 = vld [vmem:[%s397 + $0x1f0] sm:$0xff]
      %v473 = vld [vmem:[%s397 + $0x1f8] sm:$0xff]
      %v474 = vld [vmem:[%s3] sm:$0xf]
      %v475 = vld [vmem:[%s4] sm:$0x1]
      %v477 = vlaneseq
      %v478 = vshrl.u32 %v477, 7
      %v479 = vsub.s32 0, %v478
      %v480 = vrot.slane %v475, %v479
      %vm482 = vcmask 31744
      %v484 = vsel %vm482, %v410, 0
      %v487 = vsel %vm482, %v411, 0
      %v490 = vsel %vm482, %v412, 0
      %v493 = vsel %vm482, %v413, 0
      %v496 = vsel %vm482, %v414, 0
      %v499 = vsel %vm482, %v415, 0
      %v502 = vsel %vm482, %v416, 0
      %v505 = vsel %vm482, %v417, 0
      %v508 = vsel %vm482, %v418, 0
      %v511 = vsel %vm482, %v419, 0
      %v514 = vsel %vm482, %v420, 0
      %v517 = vsel %vm482, %v421, 0
      %v520 = vsel %vm482, %v422, 0
      %v523 = vsel %vm482, %v423, 0
      %v526 = vsel %vm482, %v424, 0
      %v529 = vsel %vm482, %v425, 0
      %v532 = vsel %vm482, %v426, 0
      %v535 = vsel %vm482, %v427, 0
      %v538 = vsel %vm482, %v428, 0
      %v541 = vsel %vm482, %v429, 0
      %v544 = vsel %vm482, %v430, 0
      %v547 = vsel %vm482, %v431, 0
      %v550 = vsel %vm482, %v432, 0
      %v553 = vsel %vm482, %v433, 0
      %v556 = vsel %vm482, %v434, 0
      %v559 = vsel %vm482, %v435, 0
      %v562 = vsel %vm482, %v436, 0
      %v565 = vsel %vm482, %v437, 0
      %v568 = vsel %vm482, %v438, 0
      %v571 = vsel %vm482, %v439, 0
      %v574 = vsel %vm482, %v440, 0
      %v577 = vsel %vm482, %v441, 0
      %v580 = vsel %vm482, %v442, 0
      %v583 = vsel %vm482, %v443, 0
      %v586 = vsel %vm482, %v444, 0
      %v589 = vsel %vm482, %v445, 0
      %v592 = vsel %vm482, %v446, 0
      %v595 = vsel %vm482, %v447, 0
      %v598 = vsel %vm482, %v448, 0
      %v601 = vsel %vm482, %v449, 0
      %v604 = vsel %vm482, %v450, 0
      %v607 = vsel %vm482, %v451, 0
      %v610 = vsel %vm482, %v452, 0
      %v613 = vsel %vm482, %v453, 0
      %v616 = vsel %vm482, %v454, 0
      %v619 = vsel %vm482, %v455, 0
      %v622 = vsel %vm482, %v456, 0
      %v625 = vsel %vm482, %v457, 0
      %v628 = vsel %vm482, %v458, 0
      %v631 = vsel %vm482, %v459, 0
      %v634 = vsel %vm482, %v460, 0
      %v637 = vsel %vm482, %v461, 0
      %v640 = vsel %vm482, %v462, 0
      %v643 = vsel %vm482, %v463, 0
      %v646 = vsel %vm482, %v464, 0
      %v649 = vsel %vm482, %v465, 0
      %v652 = vsel %vm482, %v466, 0
      %v655 = vsel %vm482, %v467, 0
      %v658 = vsel %vm482, %v468, 0
      %v661 = vsel %vm482, %v469, 0
      %v664 = vsel %vm482, %v470, 0
      %v667 = vsel %vm482, %v471, 0
      %v670 = vsel %vm482, %v472, 0
      %v673 = vsel %vm482, %v473, 0
      %vm675 = vcmask 1043456
      %v677 = vsel %vm675, %v474, 0
      %679 = vmatprep.subr.mxu0 0.0
      %680 = vmatpush1.msra.mxu0 %v677
      %681 = vmatprep.subr.mxu0 0.0
      %682 = vmatpush1.msra.mxu0 0.0
      %683 = vmatprep.subr.mxu0 0.0
      %684 = vmatpush1.msra.mxu0 0.0
      %685 = vmatprep.subr.mxu0 0.0
      %686 = vmatpush1.msra.mxu0 0.0
      %687 = vmatprep.subr.mxu0 0.0
      %688 = vmatpush1.msra.mxu0 0.0
      %689 = vmatprep.subr.mxu0 0.0
      %690 = vmatpush1.msra.mxu0 0.0
      %691 = vmatprep.subr.mxu0 0.0
      %692 = vmatpush1.msra.mxu0 0.0
      %693 = vmatprep.subr.mxu0 0.0
      %694 = vmatpush1.msra.mxu0 0.0
      %695 = vmatprep.subr.mxu0 0.0
      %696 = vmatpush1.msra.mxu0 0.0
      %697 = vmatprep.subr.mxu0 0.0
      %698 = vmatpush1.msra.mxu0 0.0
      %699 = vmatprep.subr.mxu0 0.0
      %700 = vmatpush1.msra.mxu0 0.0
      %701 = vmatprep.subr.mxu0 0.0
      %702 = vmatpush1.msra.mxu0 0.0
      %703 = vmatprep.subr.mxu0 0.0
      %704 = vmatpush1.msra.mxu0 0.0
      %705 = vmatprep.subr.mxu0 0.0
      %706 = vmatpush1.msra.mxu0 0.0
      %707 = vmatprep.subr.mxu0 0.0
      %708 = vmatpush1.msra.mxu0 0.0
      %709 = vmatprep.subr.mxu0 0.0
      %710 = vmatpush1.msra.mxu0 0.0
      %711 = vmatprep.subr.mxu0 0.0
      %712 = vmatpush1.msra.mxu0 0.0
      %713 = vmatprep.subr.mxu0 0.0
      %714 = vmatpush1.msra.mxu0 0.0
      %715 = vmatprep.subr.mxu0 0.0
      %716 = vmatpush1.msra.mxu0 0.0
      %717 = vmatprep.subr.mxu0 0.0
      %718 = vmatpush1.msra.mxu0 0.0
      %719 = vmatprep.subr.mxu0 0.0
      %720 = vmatpush1.msra.mxu0 0.0
      %721 = vmatprep.subr.mxu0 0.0
      %722 = vmatpush1.msra.mxu0 0.0
      %723 = vmatprep.subr.mxu0 0.0
      %724 = vmatpush1.msra.mxu0 0.0
      %725 = vmatprep.subr.mxu0 0.0
      %726 = vmatpush1.msra.mxu0 0.0
      %727 = vmatprep.subr.mxu0 0.0
      %728 = vmatpush1.msra.mxu0 0.0
      %729 = vmatprep.subr.mxu0 0.0
      %730 = vmatpush1.msra.mxu0 0.0
      %731 = vmatprep.subr.mxu0 0.0
      %732 = vmatpush1.msra.mxu0 0.0
      %733 = vmatprep.subr.mxu0 0.0
      %734 = vmatpush1.msra.mxu0 0.0
      %735 = vmatprep.subr.mxu0 0.0
      %736 = vmatpush1.msra.mxu0 0.0
      %737 = vmatprep.subr.mxu0 0.0
      %738 = vmatpush1.msra.mxu0 0.0
      %739 = vmatprep.subr.mxu0 0.0
      %740 = vmatpush1.msra.mxu0 0.0
      %741 = vmatprep.subr.mxu0 0.0
      %742 = vmatpush1.msra.mxu0 0.0
      %743 = vmatprep.mubr.f32.mxu0 0.0
      %744 = vmatmul.mubr.f32.gmra.mrb[0].mxu0 %v484
      %v745 = vpop.f32.mrb[0].mxu0
      %v746 = vadd.f32 %v480, %v745
      %v747 = vpop.f32.mrb[0].mxu0
      %748 = vmatprep.mubr.f32.mxu0 0.0
      %749 = vmatmul.mubr.f32.gmra.mrb[0].mxu0 %v487
      %v750 = vpop.f32.mrb[0].mxu0
      %v751 = vadd.f32 %v480, %v750
      %v752 = vpop.f32.mrb[0].mxu0
      %753 = vmatprep.mubr.f32.mxu0 0.0
      %754 = vmatmul.mubr.f32.gmra.mrb[0].mxu0 %v490
      %v755 = vpop.f32.mrb[0].mxu0
      %v756 = vadd.f32 %v480, %v755
      %v757 = vpop.f32.mrb[0].mxu0
      %758 = vmatprep.mubr.f32.mxu0 0.0
      %759 = vmatmul.mubr.f32.gmra.mrb[0].mxu0 %v493
      %v760 = vpop.f32.mrb[0].mxu0
      %v761 = vadd.f32 %v480, %v760
      %v762 = vpop.f32.mrb[0].mxu0
      %763 = vmatprep.mubr.f32.mxu0 0.0
      %764 = vmatmul.mubr.f32.gmra.mrb[0].mxu0 %v496
      %v765 = vpop.f32.mrb[0].mxu0
      %v766 = vadd.f32 %v480, %v765
      %v767 = vpop.f32.mrb[0].mxu0
      %768 = vmatprep.mubr.f32.mxu0 0.0
      %769 = vmatmul.mubr.f32.gmra.mrb[0].mxu0 %v499
      %v770 = vpop.f32.mrb[0].mxu0
      %v771 = vadd.f32 %v480, %v770
      %v772 = vpop.f32.mrb[0].mxu0
      %773 = vmatprep.mubr.f32.mxu0 0.0
      %774 = vmatmul.mubr.f32.gmra.mrb[0].mxu0 %v502
      %v775 = vpop.f32.mrb[0].mxu0
      %v776 = vadd.f32 %v480, %v775
      %v777 = vpop.f32.mrb[0].mxu0
      %778 = vmatprep.mubr.f32.mxu0 0.0
      %779 = vmatmul.mubr.f32.gmra.mrb[0].mxu0 %v505
      %v780 = vpop.f32.mrb[0].mxu0
      %v781 = vadd.f32 %v480, %v780
      %v782 = vpop.f32.mrb[0].mxu0
      %783 = vmatprep.mubr.f32.mxu0 0.0
      %784 = vmatmul.mubr.f32.gmra.mrb[0].mxu0 %v508
      %v785 = vpop.f32.mrb[0].mxu0
      %v786 = vadd.f32 %v480, %v785
      %v787 = vpop.f32.mrb[0].mxu0
      %788 = vmatprep.mubr.f32.mxu0 0.0
      %789 = vmatmul.mubr.f32.gmra.mrb[0].mxu0 %v511
      %v790 = vpop.f32.mrb[0].mxu0
      %v791 = vadd.f32 %v480, %v790
      %v792 = vpop.f32.mrb[0].mxu0
      %793 = vmatprep.mubr.f32.mxu0 0.0
      %794 = vmatmul.mubr.f32.gmra.mrb[0].mxu0 %v514
      %v795 = vpop.f32.mrb[0].mxu0
      %v796 = vadd.f32 %v480, %v795
      %v797 = vpop.f32.mrb[0].mxu0
      %798 = vmatprep.mubr.f32.mxu0 0.0
      %799 = vmatmul.mubr.f32.gmra.mrb[0].mxu0 %v517
      %v800 = vpop.f32.mrb[0].mxu0
      %v801 = vadd.f32 %v480, %v800
      %v802 = vpop.f32.mrb[0].mxu0
      %803 = vmatprep.mubr.f32.mxu0 0.0
      %804 = vmatmul.mubr.f32.gmra.mrb[0].mxu0 %v520
      %v805 = vpop.f32.mrb[0].mxu0
      %v806 = vadd.f32 %v480, %v805
      %v807 = vpop.f32.mrb[0].mxu0
      %808 = vmatprep.mubr.f32.mxu0 0.0
      %809 = vmatmul.mubr.f32.gmra.mrb[0].mxu0 %v523
      %v810 = vpop.f32.mrb[0].mxu0
      %v811 = vadd.f32 %v480, %v810
      %v812 = vpop.f32.mrb[0].mxu0
      %813 = vmatprep.mubr.f32.mxu0 0.0
      %814 = vmatmul.mubr.f32.gmra.mrb[0].mxu0 %v526
      %v815 = vpop.f32.mrb[0].mxu0
      %v816 = vadd.f32 %v480, %v815
      %v817 = vpop.f32.mrb[0].mxu0
      %818 = vmatprep.mubr.f32.mxu0 0.0
      %819 = vmatmul.mubr.f32.gmra.mrb[0].mxu0 %v529
      %v820 = vpop.f32.mrb[0].mxu0
      %v821 = vadd.f32 %v480, %v820
      %v822 = vpop.f32.mrb[0].mxu0
      %823 = vmatprep.mubr.f32.mxu0 0.0
      %824 = vmatmul.mubr.f32.gmra.mrb[0].mxu0 %v532
      %v825 = vpop.f32.mrb[0].mxu0
      %v826 = vadd.f32 %v480, %v825
      %v827 = vpop.f32.mrb[0].mxu0
      %828 = vmatprep.mubr.f32.mxu0 0.0
      %829 = vmatmul.mubr.f32.gmra.mrb[0].mxu0 %v535
      %v830 = vpop.f32.mrb[0].mxu0
      %v831 = vadd.f32 %v480, %v830
      %v832 = vpop.f32.mrb[0].mxu0
      %833 = vmatprep.mubr.f32.mxu0 0.0
      %834 = vmatmul.mubr.f32.gmra.mrb[0].mxu0 %v538
      %v835 = vpop.f32.mrb[0].mxu0
      %v836 = vadd.f32 %v480, %v835
      %v837 = vpop.f32.mrb[0].mxu0
      %838 = vmatprep.mubr.f32.mxu0 0.0
      %839 = vmatmul.mubr.f32.gmra.mrb[0].mxu0 %v541
      %v840 = vpop.f32.mrb[0].mxu0
      %v841 = vadd.f32 %v480, %v840
      %v842 = vpop.f32.mrb[0].mxu0
      %843 = vmatprep.mubr.f32.mxu0 0.0
      %844 = vmatmul.mubr.f32.gmra.mrb[0].mxu0 %v544
      %v845 = vpop.f32.mrb[0].mxu0
      %v846 = vadd.f32 %v480, %v845
      %v847 = vpop.f32.mrb[0].mxu0
      %848 = vmatprep.mubr.f32.mxu0 0.0
      %849 = vmatmul.mubr.f32.gmra.mrb[0].mxu0 %v547
      %v850 = vpop.f32.mrb[0].mxu0
      %v851 = vadd.f32 %v480, %v850
      %v852 = vpop.f32.mrb[0].mxu0
      %853 = vmatprep.mubr.f32.mxu0 0.0
      %854 = vmatmul.mubr.f32.gmra.mrb[0].mxu0 %v550
      %v855 = vpop.f32.mrb[0].mxu0
      %v856 = vadd.f32 %v480, %v855
      %v857 = vpop.f32.mrb[0].mxu0
      %858 = vmatprep.mubr.f32.mxu0 0.0
      %859 = vmatmul.mubr.f32.gmra.mrb[0].mxu0 %v553
      %v860 = vpop.f32.mrb[0].mxu0
      %v861 = vadd.f32 %v480, %v860
      %v862 = vpop.f32.mrb[0].mxu0
      %863 = vmatprep.mubr.f32.mxu0 0.0
      %864 = vmatmul.mubr.f32.gmra.mrb[0].mxu0 %v556
      %v865 = vpop.f32.mrb[0].mxu0
      %v866 = vadd.f32 %v480, %v865
      %v867 = vpop.f32.mrb[0].mxu0
      %868 = vmatprep.mubr.f32.mxu0 0.0
      %869 = vmatmul.mubr.f32.gmra.mrb[0].mxu0 %v559
      %v870 = vpop.f32.mrb[0].mxu0
      %v871 = vadd.f32 %v480, %v870
      %v872 = vpop.f32.mrb[0].mxu0
      %873 = vmatprep.mubr.f32.mxu0 0.0
      %874 = vmatmul.mubr.f32.gmra.mrb[0].mxu0 %v562
      %v875 = vpop.f32.mrb[0].mxu0
      %v876 = vadd.f32 %v480, %v875
      %v877 = vpop.f32.mrb[0].mxu0
      %878 = vmatprep.mubr.f32.mxu0 0.0
      %879 = vmatmul.mubr.f32.gmra.mrb[0].mxu0 %v565
      %v880 = vpop.f32.mrb[0].mxu0
      %v881 = vadd.f32 %v480, %v880
      %v882 = vpop.f32.mrb[0].mxu0
      %883 = vmatprep.mubr.f32.mxu0 0.0
      %884 = vmatmul.mubr.f32.gmra.mrb[0].mxu0 %v568
      %v885 = vpop.f32.mrb[0].mxu0
      %v886 = vadd.f32 %v480, %v885
      %v887 = vpop.f32.mrb[0].mxu0
      %888 = vmatprep.mubr.f32.mxu0 0.0
      %889 = vmatmul.mubr.f32.gmra.mrb[0].mxu0 %v571
      %v890 = vpop.f32.mrb[0].mxu0
      %v891 = vadd.f32 %v480, %v890
      %v892 = vpop.f32.mrb[0].mxu0
      %893 = vmatprep.mubr.f32.mxu0 0.0
      %894 = vmatmul.mubr.f32.gmra.mrb[0].mxu0 %v574
      %v895 = vpop.f32.mrb[0].mxu0
      %v896 = vadd.f32 %v480, %v895
      %v897 = vpop.f32.mrb[0].mxu0
      %898 = vmatprep.mubr.f32.mxu0 0.0
      %899 = vmatmul.mubr.f32.gmra.mrb[0].mxu0 %v577
      %v900 = vpop.f32.mrb[0].mxu0
      %v901 = vadd.f32 %v480, %v900
      %v902 = vpop.f32.mrb[0].mxu0
      %903 = vmatprep.mubr.f32.mxu0 0.0
      %904 = vmatmul.mubr.f32.gmra.mrb[0].mxu0 %v580
      %v905 = vpop.f32.mrb[0].mxu0
      %v906 = vadd.f32 %v480, %v905
      %v907 = vpop.f32.mrb[0].mxu0
      %908 = vmatprep.mubr.f32.mxu0 0.0
      %909 = vmatmul.mubr.f32.gmra.mrb[0].mxu0 %v583
      %v910 = vpop.f32.mrb[0].mxu0
      %v911 = vadd.f32 %v480, %v910
      %v912 = vpop.f32.mrb[0].mxu0
      %913 = vmatprep.mubr.f32.mxu0 0.0
      %914 = vmatmul.mubr.f32.gmra.mrb[0].mxu0 %v586
      %v915 = vpop.f32.mrb[0].mxu0
      %v916 = vadd.f32 %v480, %v915
      %v917 = vpop.f32.mrb[0].mxu0
      %918 = vmatprep.mubr.f32.mxu0 0.0
      %919 = vmatmul.mubr.f32.gmra.mrb[0].mxu0 %v589
      %v920 = vpop.f32.mrb[0].mxu0
      %v921 = vadd.f32 %v480, %v920
      %v922 = vpop.f32.mrb[0].mxu0
      %923 = vmatprep.mubr.f32.mxu0 0.0
      %924 = vmatmul.mubr.f32.gmra.mrb[0].mxu0 %v592
      %v925 = vpop.f32.mrb[0].mxu0
      %v926 = vadd.f32 %v480, %v925
      %v927 = vpop.f32.mrb[0].mxu0
      %928 = vmatprep.mubr.f32.mxu0 0.0
      %929 = vmatmul.mubr.f32.gmra.mrb[0].mxu0 %v595
      %v930 = vpop.f32.mrb[0].mxu0
      %v931 = vadd.f32 %v480, %v930
      %v932 = vpop.f32.mrb[0].mxu0
      %933 = vmatprep.mubr.f32.mxu0 0.0
      %934 = vmatmul.mubr.f32.gmra.mrb[0].mxu0 %v598
      %v935 = vpop.f32.mrb[0].mxu0
      %v936 = vadd.f32 %v480, %v935
      %v937 = vpop.f32.mrb[0].mxu0
      %938 = vmatprep.mubr.f32.mxu0 0.0
      %939 = vmatmul.mubr.f32.gmra.mrb[0].mxu0 %v601
      %v940 = vpop.f32.mrb[0].mxu0
      %v941 = vadd.f32 %v480, %v940
      %v942 = vpop.f32.mrb[0].mxu0
      %943 = vmatprep.mubr.f32.mxu0 0.0
      %944 = vmatmul.mubr.f32.gmra.mrb[0].mxu0 %v604
      %v945 = vpop.f32.mrb[0].mxu0
      %v946 = vadd.f32 %v480, %v945
      %v947 = vpop.f32.mrb[0].mxu0
      %948 = vmatprep.mubr.f32.mxu0 0.0
      %949 = vmatmul.mubr.f32.gmra.mrb[0].mxu0 %v607
      %v950 = vpop.f32.mrb[0].mxu0
      %v951 = vadd.f32 %v480, %v950
      %v952 = vpop.f32.mrb[0].mxu0
      %953 = vmatprep.mubr.f32.mxu0 0.0
      %954 = vmatmul.mubr.f32.gmra.mrb[0].mxu0 %v610
      %v955 = vpop.f32.mrb[0].mxu0
      %v956 = vadd.f32 %v480, %v955
      %v957 = vpop.f32.mrb[0].mxu0
      %958 = vmatprep.mubr.f32.mxu0 0.0
      %959 = vmatmul.mubr.f32.gmra.mrb[0].mxu0 %v613
      %v960 = vpop.f32.mrb[0].mxu0
      %v961 = vadd.f32 %v480, %v960
      %v962 = vpop.f32.mrb[0].mxu0
      %963 = vmatprep.mubr.f32.mxu0 0.0
      %964 = vmatmul.mubr.f32.gmra.mrb[0].mxu0 %v616
      %v965 = vpop.f32.mrb[0].mxu0
      %v966 = vadd.f32 %v480, %v965
      %v967 = vpop.f32.mrb[0].mxu0
      %968 = vmatprep.mubr.f32.mxu0 0.0
      %969 = vmatmul.mubr.f32.gmra.mrb[0].mxu0 %v619
      %v970 = vpop.f32.mrb[0].mxu0
      %v971 = vadd.f32 %v480, %v970
      %v972 = vpop.f32.mrb[0].mxu0
      %973 = vmatprep.mubr.f32.mxu0 0.0
      %974 = vmatmul.mubr.f32.gmra.mrb[0].mxu0 %v622
      %v975 = vpop.f32.mrb[0].mxu0
      %v976 = vadd.f32 %v480, %v975
      %v977 = vpop.f32.mrb[0].mxu0
      %978 = vmatprep.mubr.f32.mxu0 0.0
      %979 = vmatmul.mubr.f32.gmra.mrb[0].mxu0 %v625
      %v980 = vpop.f32.mrb[0].mxu0
      %v981 = vadd.f32 %v480, %v980
      %v982 = vpop.f32.mrb[0].mxu0
      %983 = vmatprep.mubr.f32.mxu0 0.0
      %984 = vmatmul.mubr.f32.gmra.mrb[0].mxu0 %v628
      %v985 = vpop.f32.mrb[0].mxu0
      %v986 = vadd.f32 %v480, %v985
      %v987 = vpop.f32.mrb[0].mxu0
      %988 = vmatprep.mubr.f32.mxu0 0.0
      %989 = vmatmul.mubr.f32.gmra.mrb[0].mxu0 %v631
      %v990 = vpop.f32.mrb[0].mxu0
      %v991 = vadd.f32 %v480, %v990
      %v992 = vpop.f32.mrb[0].mxu0
      %993 = vmatprep.mubr.f32.mxu0 0.0
      %994 = vmatmul.mubr.f32.gmra.mrb[0].mxu0 %v634
      %v995 = vpop.f32.mrb[0].mxu0
      %v996 = vadd.f32 %v480, %v995
      %v997 = vpop.f32.mrb[0].mxu0
      %998 = vmatprep.mubr.f32.mxu0 0.0
      %999 = vmatmul.mubr.f32.gmra.mrb[0].mxu0 %v637
      %v1000 = vpop.f32.mrb[0].mxu0
      %v1001 = vadd.f32 %v480, %v1000
      %v1002 = vpop.f32.mrb[0].mxu0
      %1003 = vmatprep.mubr.f32.mxu0 0.0
      %1004 = vmatmul.mubr.f32.gmra.mrb[0].mxu0 %v640
      %v1005 = vpop.f32.mrb[0].mxu0
      %v1006 = vadd.f32 %v480, %v1005
      %v1007 = vpop.f32.mrb[0].mxu0
      %1008 = vmatprep.mubr.f32.mxu0 0.0
      %1009 = vmatmul.mubr.f32.gmra.mrb[0].mxu0 %v643
      %v1010 = vpop.f32.mrb[0].mxu0
      %v1011 = vadd.f32 %v480, %v1010
      %v1012 = vpop.f32.mrb[0].mxu0
      %1013 = vmatprep.mubr.f32.mxu0 0.0
      %1014 = vmatmul.mubr.f32.gmra.mrb[0].mxu0 %v646
      %v1015 = vpop.f32.mrb[0].mxu0
      %v1016 = vadd.f32 %v480, %v1015
      %v1017 = vpop.f32.mrb[0].mxu0
      %1018 = vmatprep.mubr.f32.mxu0 0.0
      %1019 = vmatmul.mubr.f32.gmra.mrb[0].mxu0 %v649
      %v1020 = vpop.f32.mrb[0].mxu0
      %v1021 = vadd.f32 %v480, %v1020
      %v1022 = vpop.f32.mrb[0].mxu0
      %1023 = vmatprep.mubr.f32.mxu0 0.0
      %1024 = vmatmul.mubr.f32.gmra.mrb[0].mxu0 %v652
      %v1025 = vpop.f32.mrb[0].mxu0
      %v1026 = vadd.f32 %v480, %v1025
      %v1027 = vpop.f32.mrb[0].mxu0
      %1028 = vmatprep.mubr.f32.mxu0 0.0
      %1029 = vmatmul.mubr.f32.gmra.mrb[0].mxu0 %v655
      %v1030 = vpop.f32.mrb[0].mxu0
      %v1031 = vadd.f32 %v480, %v1030
      %v1032 = vpop.f32.mrb[0].mxu0
      %1033 = vmatprep.mubr.f32.mxu0 0.0
      %1034 = vmatmul.mubr.f32.gmra.mrb[0].mxu0 %v658
      %v1035 = vpop.f32.mrb[0].mxu0
      %v1036 = vadd.f32 %v480, %v1035
      %v1037 = vpop.f32.mrb[0].mxu0
      %1038 = vmatprep.mubr.f32.mxu0 0.0
      %1039 = vmatmul.mubr.f32.gmra.mrb[0].mxu0 %v661
      %v1040 = vpop.f32.mrb[0].mxu0
      %v1041 = vadd.f32 %v480, %v1040
      %v1042 = vpop.f32.mrb[0].mxu0
      %1043 = vmatprep.mubr.f32.mxu0 0.0
      %1044 = vmatmul.mubr.f32.gmra.mrb[0].mxu0 %v664
      %v1045 = vpop.f32.mrb[0].mxu0
      %v1046 = vadd.f32 %v480, %v1045
      %v1047 = vpop.f32.mrb[0].mxu0
      %1048 = vmatprep.mubr.f32.mxu0 0.0
      %1049 = vmatmul.mubr.f32.gmra.mrb[0].mxu0 %v667
      %v1050 = vpop.f32.mrb[0].mxu0
      %v1051 = vadd.f32 %v480, %v1050
      %v1052 = vpop.f32.mrb[0].mxu0
      %1053 = vmatprep.mubr.f32.mxu0 0.0
      %1054 = vmatmul.mubr.f32.gmra.mrb[0].mxu0 %v670
      %v1055 = vpop.f32.mrb[0].mxu0
      %v1056 = vadd.f32 %v480, %v1055
      %v1057 = vpop.f32.mrb[0].mxu0
      %1058 = vmatprep.mubr.f32.mxu0 0.0
      %1059 = vmatmul.mubr.f32.gmra.mrb[0].mxu0 %v673
      %v1060 = vpop.f32.mrb[0].mxu0
      %v1061 = vadd.f32 %v480, %v1060
      %v1062 = vpop.f32.mrb[0].mxu0
      %1063 = vdwg.mxu0
      %v1064 = vmax.f32 %v746, 0.0
      %v1065 = vmax.f32 %v751, 0.0
      %v1066 = vmax.f32 %v756, 0.0
      %v1067 = vmax.f32 %v761, 0.0
      %v1068 = vmax.f32 %v766, 0.0
      %v1069 = vmax.f32 %v771, 0.0
      %v1070 = vmax.f32 %v776, 0.0
      %v1071 = vmax.f32 %v781, 0.0
      %v1072 = vmax.f32 %v786, 0.0
      %v1073 = vmax.f32 %v791, 0.0
      %v1074 = vmax.f32 %v796, 0.0
      %v1075 = vmax.f32 %v801, 0.0
      %v1076 = vmax.f32 %v806, 0.0
      %v1077 = vmax.f32 %v811, 0.0
      %v1078 = vmax.f32 %v816, 0.0
      %v1079 = vmax.f32 %v821, 0.0
      %v1080 = vmax.f32 %v826, 0.0
      %v1081 = vmax.f32 %v831, 0.0
      %v1082 = vmax.f32 %v836, 0.0
      %v1083 = vmax.f32 %v841, 0.0
      %v1084 = vmax.f32 %v846, 0.0
      %v1085 = vmax.f32 %v851, 0.0
      %v1086 = vmax.f32 %v856, 0.0
      %v1087 = vmax.f32 %v861, 0.0
      %v1088 = vmax.f32 %v866, 0.0
      %v1089 = vmax.f32 %v871, 0.0
      %v1090 = vmax.f32 %v876, 0.0
      %v1091 = vmax.f32 %v881, 0.0
      %v1092 = vmax.f32 %v886, 0.0
      %v1093 = vmax.f32 %v891, 0.0
      %v1094 = vmax.f32 %v896, 0.0
      %v1095 = vmax.f32 %v901, 0.0
      %v1096 = vmax.f32 %v906, 0.0
      %v1097 = vmax.f32 %v911, 0.0
      %v1098 = vmax.f32 %v916, 0.0
      %v1099 = vmax.f32 %v921, 0.0
      %v1100 = vmax.f32 %v926, 0.0
      %v1101 = vmax.f32 %v931, 0.0
      %v1102 = vmax.f32 %v936, 0.0
      %v1103 = vmax.f32 %v941, 0.0
      %v1104 = vmax.f32 %v946, 0.0
      %v1105 = vmax.f32 %v951, 0.0
      %v1106 = vmax.f32 %v956, 0.0
      %v1107 = vmax.f32 %v961, 0.0
      %v1108 = vmax.f32 %v966, 0.0
      %v1109 = vmax.f32 %v971, 0.0
      %v1110 = vmax.f32 %v976, 0.0
      %v1111 = vmax.f32 %v981, 0.0
      %v1112 = vmax.f32 %v986, 0.0
      %v1113 = vmax.f32 %v991, 0.0
      %v1114 = vmax.f32 %v996, 0.0
      %v1115 = vmax.f32 %v1001, 0.0
      %v1116 = vmax.f32 %v1006, 0.0
      %v1117 = vmax.f32 %v1011, 0.0
      %v1118 = vmax.f32 %v1016, 0.0
      %v1119 = vmax.f32 %v1021, 0.0
      %v1120 = vmax.f32 %v1026, 0.0
      %v1121 = vmax.f32 %v1031, 0.0
      %v1122 = vmax.f32 %v1036, 0.0
      %v1123 = vmax.f32 %v1041, 0.0
      %v1124 = vmax.f32 %v1046, 0.0
      %v1125 = vmax.f32 %v1051, 0.0
      %v1126 = vmax.f32 %v1056, 0.0
      %v1127 = vmax.f32 %v1061, 0.0
      %v1128 = vld [vmem:[%s5] sm:$0xff]
      %v1129 = vld [vmem:[%s5 + $0x8] sm:$0xff]
      %v1130 = vld [vmem:[%s5 + $0x10] sm:$0xff]
      %v1131 = vld [vmem:[%s5 + $0x18] sm:$0xff]
      %v1132 = vld [vmem:[%s6] sm:$0x1]
      %v1134 = vlaneseq
      %v1135 = vshrl.u32 %v1134, 7
      %v1136 = vsub.s32 0, %v1135
      %v1137 = vrot.slane %v1132, %v1136
      %vm1139 = vcmask 261120
      %v1141 = vsel %vm1139, %v1064, 0
      %v1144 = vsel %vm1139, %v1065, 0
      %v1147 = vsel %vm1139, %v1066, 0
      %v1150 = vsel %vm1139, %v1067, 0
      %v1153 = vsel %vm1139, %v1068, 0
      %v1156 = vsel %vm1139, %v1069, 0
      %v1159 = vsel %vm1139, %v1070, 0
      %v1162 = vsel %vm1139, %v1071, 0
      %v1165 = vsel %vm1139, %v1072, 0
      %v1168 = vsel %vm1139, %v1073, 0
      %v1171 = vsel %vm1139, %v1074, 0
      %v1174 = vsel %vm1139, %v1075, 0
      %v1177 = vsel %vm1139, %v1076, 0
      %v1180 = vsel %vm1139, %v1077, 0
      %v1183 = vsel %vm1139, %v1078, 0
      %v1186 = vsel %vm1139, %v1079, 0
      %v1189 = vsel %vm1139, %v1080, 0
      %v1192 = vsel %vm1139, %v1081, 0
      %v1195 = vsel %vm1139, %v1082, 0
      %v1198 = vsel %vm1139, %v1083, 0
      %v1201 = vsel %vm1139, %v1084, 0
      %v1204 = vsel %vm1139, %v1085, 0
      %v1207 = vsel %vm1139, %v1086, 0
      %v1210 = vsel %vm1139, %v1087, 0
      %v1213 = vsel %vm1139, %v1088, 0
      %v1216 = vsel %vm1139, %v1089, 0
      %v1219 = vsel %vm1139, %v1090, 0
      %v1222 = vsel %vm1139, %v1091, 0
      %v1225 = vsel %vm1139, %v1092, 0
      %v1228 = vsel %vm1139, %v1093, 0
      %v1231 = vsel %vm1139, %v1094, 0
      %v1234 = vsel %vm1139, %v1095, 0
      %v1237 = vsel %vm1139, %v1096, 0
      %v1240 = vsel %vm1139, %v1097, 0
      %v1243 = vsel %vm1139, %v1098, 0
      %v1246 = vsel %vm1139, %v1099, 0
      %v1249 = vsel %vm1139, %v1100, 0
      %v1252 = vsel %vm1139, %v1101, 0
      %v1255 = vsel %vm1139, %v1102, 0
      %v1258 = vsel %vm1139, %v1103, 0
      %v1261 = vsel %vm1139, %v1104, 0
      %v1264 = vsel %vm1139, %v1105, 0
      %v1267 = vsel %vm1139, %v1106, 0
      %v1270 = vsel %vm1139, %v1107, 0
      %v1273 = vsel %vm1139, %v1108, 0
      %v1276 = vsel %vm1139, %v1109, 0
      %v1279 = vsel %vm1139, %v1110, 0
      %v1282 = vsel %vm1139, %v1111, 0
      %v1285 = vsel %vm1139, %v1112, 0
      %v1288 = vsel %vm1139, %v1113, 0
      %v1291 = vsel %vm1139, %v1114, 0
      %v1294 = vsel %vm1139, %v1115, 0
      %v1297 = vsel %vm1139, %v1116, 0
      %v1300 = vsel %vm1139, %v1117, 0
      %v1303 = vsel %vm1139, %v1118, 0
      %v1306 = vsel %vm1139, %v1119, 0
      %v1309 = vsel %vm1139, %v1120, 0
      %v1312 = vsel %vm1139, %v1121, 0
      %v1315 = vsel %vm1139, %v1122, 0
      %v1318 = vsel %vm1139, %v1123, 0
      %v1321 = vsel %vm1139, %v1124, 0
      %v1324 = vsel %vm1139, %v1125, 0
      %v1327 = vsel %vm1139, %v1126, 0
      %v1330 = vsel %vm1139, %v1127, 0
      %1332 = vmatprep.subr.mxu0 0.0
      %1333 = vmatpush1.msra.mxu0 %v1128
      %1334 = vmatprep.subr.mxu0 0.0
      %1335 = vmatpush1.msra.mxu0 %v1129
      %1336 = vmatprep.subr.mxu0 0.0
      %1337 = vmatpush1.msra.mxu0 %v1130
      %1338 = vmatprep.subr.mxu0 0.0
      %1339 = vmatpush1.msra.mxu0 %v1131
      %1340 = vmatprep.subr.mxu0 0.0
      %1341 = vmatpush1.msra.mxu0 0.0
      %1342 = vmatprep.subr.mxu0 0.0
      %1343 = vmatpush1.msra.mxu0 0.0
      %1344 = vmatprep.subr.mxu0 0.0
      %1345 = vmatpush1.msra.mxu0 0.0
      %1346 = vmatprep.subr.mxu0 0.0
      %1347 = vmatpush1.msra.mxu0 0.0
      %1348 = vmatprep.subr.mxu0 0.0
      %1349 = vmatpush1.msra.mxu0 0.0
      %1350 = vmatprep.subr.mxu0 0.0
      %1351 = vmatpush1.msra.mxu0 0.0
      %1352 = vmatprep.subr.mxu0 0.0
      %1353 = vmatpush1.msra.mxu0 0.0
      %1354 = vmatprep.subr.mxu0 0.0
      %1355 = vmatpush1.msra.mxu0 0.0
      %1356 = vmatprep.subr.mxu0 0.0
      %1357 = vmatpush1.msra.mxu0 0.0
      %1358 = vmatprep.subr.mxu0 0.0
      %1359 = vmatpush1.msra.mxu0 0.0
      %1360 = vmatprep.subr.mxu0 0.0
      %1361 = vmatpush1.msra.mxu0 0.0
      %1362 = vmatprep.subr.mxu0 0.0
      %1363 = vmatpush1.msra.mxu0 0.0
      %1364 = vmatprep.subr.mxu0 0.0
      %1365 = vmatpush1.msra.mxu0 0.0
      %1366 = vmatprep.subr.mxu0 0.0
      %1367 = vmatpush1.msra.mxu0 0.0
      %1368 = vmatprep.subr.mxu0 0.0
      %1369 = vmatpush1.msra.mxu0 0.0
      %1370 = vmatprep.subr.mxu0 0.0
      %1371 = vmatpush1.msra.mxu0 0.0
      %1372 = vmatprep.subr.mxu0 0.0
      %1373 = vmatpush1.msra.mxu0 0.0
      %1374 = vmatprep.subr.mxu0 0.0
      %1375 = vmatpush1.msra.mxu0 0.0
      %1376 = vmatprep.subr.mxu0 0.0
      %1377 = vmatpush1.msra.mxu0 0.0
      %1378 = vmatprep.subr.mxu0 0.0
      %1379 = vmatpush1.msra.mxu0 0.0
      %1380 = vmatprep.subr.mxu0 0.0
      %1381 = vmatpush1.msra.mxu0 0.0
      %1382 = vmatprep.subr.mxu0 0.0
      %1383 = vmatpush1.msra.mxu0 0.0
      %1384 = vmatprep.subr.mxu0 0.0
      %1385 = vmatpush1.msra.mxu0 0.0
      %1386 = vmatprep.subr.mxu0 0.0
      %1387 = vmatpush1.msra.mxu0 0.0
      %1388 = vmatprep.subr.mxu0 0.0
      %1389 = vmatpush1.msra.mxu0 0.0
      %1390 = vmatprep.subr.mxu0 0.0
      %1391 = vmatpush1.msra.mxu0 0.0
      %1392 = vmatprep.subr.mxu0 0.0
      %1393 = vmatpush1.msra.mxu0 0.0
      %1394 = vmatprep.subr.mxu0 0.0
      %1395 = vmatpush1.msra.mxu0 0.0
      %1396 = vmatprep.mubr.f32.mxu0 0.0
      %1397 = vmatmul.mubr.f32.gmra.mrb[0].mxu0 %v1141
      %v1398 = vpop.f32.mrb[0].mxu0
      %v1399 = vadd.f32 %v1137, %v1398
      %v1400 = vpop.f32.mrb[0].mxu0
      %1401 = vmatprep.mubr.f32.mxu0 0.0
      %1402 = vmatmul.mubr.f32.gmra.mrb[0].mxu0 %v1144
      %v1403 = vpop.f32.mrb[0].mxu0
      %v1404 = vadd.f32 %v1137, %v1403
      %v1405 = vpop.f32.mrb[0].mxu0
      %1406 = vmatprep.mubr.f32.mxu0 0.0
      %1407 = vmatmul.mubr.f32.gmra.mrb[0].mxu0 %v1147
      %v1408 = vpop.f32.mrb[0].mxu0
      %v1409 = vadd.f32 %v1137, %v1408
      %v1410 = vpop.f32.mrb[0].mxu0
      %1411 = vmatprep.mubr.f32.mxu0 0.0
      %1412 = vmatmul.mubr.f32.gmra.mrb[0].mxu0 %v1150
      %v1413 = vpop.f32.mrb[0].mxu0
      %v1414 = vadd.f32 %v1137, %v1413
      %v1415 = vpop.f32.mrb[0].mxu0
      %1416 = vmatprep.mubr.f32.mxu0 0.0
      %1417 = vmatmul.mubr.f32.gmra.mrb[0].mxu0 %v1153
      %v1418 = vpop.f32.mrb[0].mxu0
      %v1419 = vadd.f32 %v1137, %v1418
      %v1420 = vpop.f32.mrb[0].mxu0
      %1421 = vmatprep.mubr.f32.mxu0 0.0
      %1422 = vmatmul.mubr.f32.gmra.mrb[0].mxu0 %v1156
      %v1423 = vpop.f32.mrb[0].mxu0
      %v1424 = vadd.f32 %v1137, %v1423
      %v1425 = vpop.f32.mrb[0].mxu0
      %1426 = vmatprep.mubr.f32.mxu0 0.0
      %1427 = vmatmul.mubr.f32.gmra.mrb[0].mxu0 %v1159
      %v1428 = vpop.f32.mrb[0].mxu0
      %v1429 = vadd.f32 %v1137, %v1428
      %v1430 = vpop.f32.mrb[0].mxu0
      %1431 = vmatprep.mubr.f32.mxu0 0.0
      %1432 = vmatmul.mubr.f32.gmra.mrb[0].mxu0 %v1162
      %v1433 = vpop.f32.mrb[0].mxu0
      %v1434 = vadd.f32 %v1137, %v1433
      %v1435 = vpop.f32.mrb[0].mxu0
      %1436 = vmatprep.mubr.f32.mxu0 0.0
      %1437 = vmatmul.mubr.f32.gmra.mrb[0].mxu0 %v1165
      %v1438 = vpop.f32.mrb[0].mxu0
      %v1439 = vadd.f32 %v1137, %v1438
      %v1440 = vpop.f32.mrb[0].mxu0
      %1441 = vmatprep.mubr.f32.mxu0 0.0
      %1442 = vmatmul.mubr.f32.gmra.mrb[0].mxu0 %v1168
      %v1443 = vpop.f32.mrb[0].mxu0
      %v1444 = vadd.f32 %v1137, %v1443
      %v1445 = vpop.f32.mrb[0].mxu0
      %1446 = vmatprep.mubr.f32.mxu0 0.0
      %1447 = vmatmul.mubr.f32.gmra.mrb[0].mxu0 %v1171
      %v1448 = vpop.f32.mrb[0].mxu0
      %v1449 = vadd.f32 %v1137, %v1448
      %v1450 = vpop.f32.mrb[0].mxu0
      %1451 = vmatprep.mubr.f32.mxu0 0.0
      %1452 = vmatmul.mubr.f32.gmra.mrb[0].mxu0 %v1174
      %v1453 = vpop.f32.mrb[0].mxu0
      %v1454 = vadd.f32 %v1137, %v1453
      %v1455 = vpop.f32.mrb[0].mxu0
      %1456 = vmatprep.mubr.f32.mxu0 0.0
      %1457 = vmatmul.mubr.f32.gmra.mrb[0].mxu0 %v1177
      %v1458 = vpop.f32.mrb[0].mxu0
      %v1459 = vadd.f32 %v1137, %v1458
      %v1460 = vpop.f32.mrb[0].mxu0
      %1461 = vmatprep.mubr.f32.mxu0 0.0
      %1462 = vmatmul.mubr.f32.gmra.mrb[0].mxu0 %v1180
      %v1463 = vpop.f32.mrb[0].mxu0
      %v1464 = vadd.f32 %v1137, %v1463
      %v1465 = vpop.f32.mrb[0].mxu0
      %1466 = vmatprep.mubr.f32.mxu0 0.0
      %1467 = vmatmul.mubr.f32.gmra.mrb[0].mxu0 %v1183
      %v1468 = vpop.f32.mrb[0].mxu0
      %v1469 = vadd.f32 %v1137, %v1468
      %v1470 = vpop.f32.mrb[0].mxu0
      %1471 = vmatprep.mubr.f32.mxu0 0.0
      %1472 = vmatmul.mubr.f32.gmra.mrb[0].mxu0 %v1186
      %v1473 = vpop.f32.mrb[0].mxu0
      %v1474 = vadd.f32 %v1137, %v1473
      %v1475 = vpop.f32.mrb[0].mxu0
      %1476 = vmatprep.mubr.f32.mxu0 0.0
      %1477 = vmatmul.mubr.f32.gmra.mrb[0].mxu0 %v1189
      %v1478 = vpop.f32.mrb[0].mxu0
      %v1479 = vadd.f32 %v1137, %v1478
      %v1480 = vpop.f32.mrb[0].mxu0
      %1481 = vmatprep.mubr.f32.mxu0 0.0
      %1482 = vmatmul.mubr.f32.gmra.mrb[0].mxu0 %v1192
      %v1483 = vpop.f32.mrb[0].mxu0
      %v1484 = vadd.f32 %v1137, %v1483
      %v1485 = vpop.f32.mrb[0].mxu0
      %1486 = vmatprep.mubr.f32.mxu0 0.0
      %1487 = vmatmul.mubr.f32.gmra.mrb[0].mxu0 %v1195
      %v1488 = vpop.f32.mrb[0].mxu0
      %v1489 = vadd.f32 %v1137, %v1488
      %v1490 = vpop.f32.mrb[0].mxu0
      %1491 = vmatprep.mubr.f32.mxu0 0.0
      %1492 = vmatmul.mubr.f32.gmra.mrb[0].mxu0 %v1198
      %v1493 = vpop.f32.mrb[0].mxu0
      %v1494 = vadd.f32 %v1137, %v1493
      %v1495 = vpop.f32.mrb[0].mxu0
      %1496 = vmatprep.mubr.f32.mxu0 0.0
      %1497 = vmatmul.mubr.f32.gmra.mrb[0].mxu0 %v1201
      %v1498 = vpop.f32.mrb[0].mxu0
      %v1499 = vadd.f32 %v1137, %v1498
      %v1500 = vpop.f32.mrb[0].mxu0
      %1501 = vmatprep.mubr.f32.mxu0 0.0
      %1502 = vmatmul.mubr.f32.gmra.mrb[0].mxu0 %v1204
      %v1503 = vpop.f32.mrb[0].mxu0
      %v1504 = vadd.f32 %v1137, %v1503
      %v1505 = vpop.f32.mrb[0].mxu0
      %1506 = vmatprep.mubr.f32.mxu0 0.0
      %1507 = vmatmul.mubr.f32.gmra.mrb[0].mxu0 %v1207
      %v1508 = vpop.f32.mrb[0].mxu0
      %v1509 = vadd.f32 %v1137, %v1508
      %v1510 = vpop.f32.mrb[0].mxu0
      %1511 = vmatprep.mubr.f32.mxu0 0.0
      %1512 = vmatmul.mubr.f32.gmra.mrb[0].mxu0 %v1210
      %v1513 = vpop.f32.mrb[0].mxu0
      %v1514 = vadd.f32 %v1137, %v1513
      %v1515 = vpop.f32.mrb[0].mxu0
      %1516 = vmatprep.mubr.f32.mxu0 0.0
      %1517 = vmatmul.mubr.f32.gmra.mrb[0].mxu0 %v1213
      %v1518 = vpop.f32.mrb[0].mxu0
      %v1519 = vadd.f32 %v1137, %v1518
      %v1520 = vpop.f32.mrb[0].mxu0
      %1521 = vmatprep.mubr.f32.mxu0 0.0
      %1522 = vmatmul.mubr.f32.gmra.mrb[0].mxu0 %v1216
      %v1523 = vpop.f32.mrb[0].mxu0
      %v1524 = vadd.f32 %v1137, %v1523
      %v1525 = vpop.f32.mrb[0].mxu0
      %1526 = vmatprep.mubr.f32.mxu0 0.0
      %1527 = vmatmul.mubr.f32.gmra.mrb[0].mxu0 %v1219
      %v1528 = vpop.f32.mrb[0].mxu0
      %v1529 = vadd.f32 %v1137, %v1528
      %v1530 = vpop.f32.mrb[0].mxu0
      %1531 = vmatprep.mubr.f32.mxu0 0.0
      %1532 = vmatmul.mubr.f32.gmra.mrb[0].mxu0 %v1222
      %v1533 = vpop.f32.mrb[0].mxu0
      %v1534 = vadd.f32 %v1137, %v1533
      %v1535 = vpop.f32.mrb[0].mxu0
      %1536 = vmatprep.mubr.f32.mxu0 0.0
      %1537 = vmatmul.mubr.f32.gmra.mrb[0].mxu0 %v1225
      %v1538 = vpop.f32.mrb[0].mxu0
      %v1539 = vadd.f32 %v1137, %v1538
      %v1540 = vpop.f32.mrb[0].mxu0
      %1541 = vmatprep.mubr.f32.mxu0 0.0
      %1542 = vmatmul.mubr.f32.gmra.mrb[0].mxu0 %v1228
      %v1543 = vpop.f32.mrb[0].mxu0
      %v1544 = vadd.f32 %v1137, %v1543
      %v1545 = vpop.f32.mrb[0].mxu0
      %1546 = vmatprep.mubr.f32.mxu0 0.0
      %1547 = vmatmul.mubr.f32.gmra.mrb[0].mxu0 %v1231
      %v1548 = vpop.f32.mrb[0].mxu0
      %v1549 = vadd.f32 %v1137, %v1548
      %v1550 = vpop.f32.mrb[0].mxu0
      %1551 = vmatprep.mubr.f32.mxu0 0.0
      %1552 = vmatmul.mubr.f32.gmra.mrb[0].mxu0 %v1234
      %v1553 = vpop.f32.mrb[0].mxu0
      %v1554 = vadd.f32 %v1137, %v1553
      %v1555 = vpop.f32.mrb[0].mxu0
      %1556 = vmatprep.mubr.f32.mxu0 0.0
      %1557 = vmatmul.mubr.f32.gmra.mrb[0].mxu0 %v1237
      %v1558 = vpop.f32.mrb[0].mxu0
      %v1559 = vadd.f32 %v1137, %v1558
      %v1560 = vpop.f32.mrb[0].mxu0
      %1561 = vmatprep.mubr.f32.mxu0 0.0
      %1562 = vmatmul.mubr.f32.gmra.mrb[0].mxu0 %v1240
      %v1563 = vpop.f32.mrb[0].mxu0
      %v1564 = vadd.f32 %v1137, %v1563
      %v1565 = vpop.f32.mrb[0].mxu0
      %1566 = vmatprep.mubr.f32.mxu0 0.0
      %1567 = vmatmul.mubr.f32.gmra.mrb[0].mxu0 %v1243
      %v1568 = vpop.f32.mrb[0].mxu0
      %v1569 = vadd.f32 %v1137, %v1568
      %v1570 = vpop.f32.mrb[0].mxu0
      %1571 = vmatprep.mubr.f32.mxu0 0.0
      %1572 = vmatmul.mubr.f32.gmra.mrb[0].mxu0 %v1246
      %v1573 = vpop.f32.mrb[0].mxu0
      %v1574 = vadd.f32 %v1137, %v1573
      %v1575 = vpop.f32.mrb[0].mxu0
      %1576 = vmatprep.mubr.f32.mxu0 0.0
      %1577 = vmatmul.mubr.f32.gmra.mrb[0].mxu0 %v1249
      %v1578 = vpop.f32.mrb[0].mxu0
      %v1579 = vadd.f32 %v1137, %v1578
      %v1580 = vpop.f32.mrb[0].mxu0
      %1581 = vmatprep.mubr.f32.mxu0 0.0
      %1582 = vmatmul.mubr.f32.gmra.mrb[0].mxu0 %v1252
      %v1583 = vpop.f32.mrb[0].mxu0
      %v1584 = vadd.f32 %v1137, %v1583
      %v1585 = vpop.f32.mrb[0].mxu0
      %1586 = vmatprep.mubr.f32.mxu0 0.0
      %1587 = vmatmul.mubr.f32.gmra.mrb[0].mxu0 %v1255
      %v1588 = vpop.f32.mrb[0].mxu0
      %v1589 = vadd.f32 %v1137, %v1588
      %v1590 = vpop.f32.mrb[0].mxu0
      %1591 = vmatprep.mubr.f32.mxu0 0.0
      %1592 = vmatmul.mubr.f32.gmra.mrb[0].mxu0 %v1258
      %v1593 = vpop.f32.mrb[0].mxu0
      %v1594 = vadd.f32 %v1137, %v1593
      %v1595 = vpop.f32.mrb[0].mxu0
      %1596 = vmatprep.mubr.f32.mxu0 0.0
      %1597 = vmatmul.mubr.f32.gmra.mrb[0].mxu0 %v1261
      %v1598 = vpop.f32.mrb[0].mxu0
      %v1599 = vadd.f32 %v1137, %v1598
      %v1600 = vpop.f32.mrb[0].mxu0
      %1601 = vmatprep.mubr.f32.mxu0 0.0
      %1602 = vmatmul.mubr.f32.gmra.mrb[0].mxu0 %v1264
      %v1603 = vpop.f32.mrb[0].mxu0
      %v1604 = vadd.f32 %v1137, %v1603
      %v1605 = vpop.f32.mrb[0].mxu0
      %1606 = vmatprep.mubr.f32.mxu0 0.0
      %1607 = vmatmul.mubr.f32.gmra.mrb[0].mxu0 %v1267
      %v1608 = vpop.f32.mrb[0].mxu0
      %v1609 = vadd.f32 %v1137, %v1608
      %v1610 = vpop.f32.mrb[0].mxu0
      %1611 = vmatprep.mubr.f32.mxu0 0.0
      %1612 = vmatmul.mubr.f32.gmra.mrb[0].mxu0 %v1270
      %v1613 = vpop.f32.mrb[0].mxu0
      %v1614 = vadd.f32 %v1137, %v1613
      %v1615 = vpop.f32.mrb[0].mxu0
      %1616 = vmatprep.mubr.f32.mxu0 0.0
      %1617 = vmatmul.mubr.f32.gmra.mrb[0].mxu0 %v1273
      %v1618 = vpop.f32.mrb[0].mxu0
      %v1619 = vadd.f32 %v1137, %v1618
      %v1620 = vpop.f32.mrb[0].mxu0
      %1621 = vmatprep.mubr.f32.mxu0 0.0
      %1622 = vmatmul.mubr.f32.gmra.mrb[0].mxu0 %v1276
      %v1623 = vpop.f32.mrb[0].mxu0
      %v1624 = vadd.f32 %v1137, %v1623
      %v1625 = vpop.f32.mrb[0].mxu0
      %1626 = vmatprep.mubr.f32.mxu0 0.0
      %1627 = vmatmul.mubr.f32.gmra.mrb[0].mxu0 %v1279
      %v1628 = vpop.f32.mrb[0].mxu0
      %v1629 = vadd.f32 %v1137, %v1628
      %v1630 = vpop.f32.mrb[0].mxu0
      %1631 = vmatprep.mubr.f32.mxu0 0.0
      %1632 = vmatmul.mubr.f32.gmra.mrb[0].mxu0 %v1282
      %v1633 = vpop.f32.mrb[0].mxu0
      %v1634 = vadd.f32 %v1137, %v1633
      %v1635 = vpop.f32.mrb[0].mxu0
      %1636 = vmatprep.mubr.f32.mxu0 0.0
      %1637 = vmatmul.mubr.f32.gmra.mrb[0].mxu0 %v1285
      %v1638 = vpop.f32.mrb[0].mxu0
      %v1639 = vadd.f32 %v1137, %v1638
      %v1640 = vpop.f32.mrb[0].mxu0
      %1641 = vmatprep.mubr.f32.mxu0 0.0
      %1642 = vmatmul.mubr.f32.gmra.mrb[0].mxu0 %v1288
      %v1643 = vpop.f32.mrb[0].mxu0
      %v1644 = vadd.f32 %v1137, %v1643
      %v1645 = vpop.f32.mrb[0].mxu0
      %1646 = vmatprep.mubr.f32.mxu0 0.0
      %1647 = vmatmul.mubr.f32.gmra.mrb[0].mxu0 %v1291
      %v1648 = vpop.f32.mrb[0].mxu0
      %v1649 = vadd.f32 %v1137, %v1648
      %v1650 = vpop.f32.mrb[0].mxu0
      %1651 = vmatprep.mubr.f32.mxu0 0.0
      %1652 = vmatmul.mubr.f32.gmra.mrb[0].mxu0 %v1294
      %v1653 = vpop.f32.mrb[0].mxu0
      %v1654 = vadd.f32 %v1137, %v1653
      %v1655 = vpop.f32.mrb[0].mxu0
      %1656 = vmatprep.mubr.f32.mxu0 0.0
      %1657 = vmatmul.mubr.f32.gmra.mrb[0].mxu0 %v1297
      %v1658 = vpop.f32.mrb[0].mxu0
      %v1659 = vadd.f32 %v1137, %v1658
      %v1660 = vpop.f32.mrb[0].mxu0
      %1661 = vmatprep.mubr.f32.mxu0 0.0
      %1662 = vmatmul.mubr.f32.gmra.mrb[0].mxu0 %v1300
      %v1663 = vpop.f32.mrb[0].mxu0
      %v1664 = vadd.f32 %v1137, %v1663
      %v1665 = vpop.f32.mrb[0].mxu0
      %1666 = vmatprep.mubr.f32.mxu0 0.0
      %1667 = vmatmul.mubr.f32.gmra.mrb[0].mxu0 %v1303
      %v1668 = vpop.f32.mrb[0].mxu0
      %v1669 = vadd.f32 %v1137, %v1668
      %v1670 = vpop.f32.mrb[0].mxu0
      %1671 = vmatprep.mubr.f32.mxu0 0.0
      %1672 = vmatmul.mubr.f32.gmra.mrb[0].mxu0 %v1306
      %v1673 = vpop.f32.mrb[0].mxu0
      %v1674 = vadd.f32 %v1137, %v1673
      %v1675 = vpop.f32.mrb[0].mxu0
      %1676 = vmatprep.mubr.f32.mxu0 0.0
      %1677 = vmatmul.mubr.f32.gmra.mrb[0].mxu0 %v1309
      %v1678 = vpop.f32.mrb[0].mxu0
      %v1679 = vadd.f32 %v1137, %v1678
      %v1680 = vpop.f32.mrb[0].mxu0
      %1681 = vmatprep.mubr.f32.mxu0 0.0
      %1682 = vmatmul.mubr.f32.gmra.mrb[0].mxu0 %v1312
      %v1683 = vpop.f32.mrb[0].mxu0
      %v1684 = vadd.f32 %v1137, %v1683
      %v1685 = vpop.f32.mrb[0].mxu0
      %1686 = vmatprep.mubr.f32.mxu0 0.0
      %1687 = vmatmul.mubr.f32.gmra.mrb[0].mxu0 %v1315
      %v1688 = vpop.f32.mrb[0].mxu0
      %v1689 = vadd.f32 %v1137, %v1688
      %v1690 = vpop.f32.mrb[0].mxu0
      %1691 = vmatprep.mubr.f32.mxu0 0.0
      %1692 = vmatmul.mubr.f32.gmra.mrb[0].mxu0 %v1318
      %v1693 = vpop.f32.mrb[0].mxu0
      %v1694 = vadd.f32 %v1137, %v1693
      %v1695 = vpop.f32.mrb[0].mxu0
      %1696 = vmatprep.mubr.f32.mxu0 0.0
      %1697 = vmatmul.mubr.f32.gmra.mrb[0].mxu0 %v1321
      %v1698 = vpop.f32.mrb[0].mxu0
      %v1699 = vadd.f32 %v1137, %v1698
      %v1700 = vpop.f32.mrb[0].mxu0
      %1701 = vmatprep.mubr.f32.mxu0 0.0
      %1702 = vmatmul.mubr.f32.gmra.mrb[0].mxu0 %v1324
      %v1703 = vpop.f32.mrb[0].mxu0
      %v1704 = vadd.f32 %v1137, %v1703
      %v1705 = vpop.f32.mrb[0].mxu0
      %1706 = vmatprep.mubr.f32.mxu0 0.0
      %1707 = vmatmul.mubr.f32.gmra.mrb[0].mxu0 %v1327
      %v1708 = vpop.f32.mrb[0].mxu0
      %v1709 = vadd.f32 %v1137, %v1708
      %v1710 = vpop.f32.mrb[0].mxu0
      %1711 = vmatprep.mubr.f32.mxu0 0.0
      %1712 = vmatmul.mubr.f32.gmra.mrb[0].mxu0 %v1330
      %v1713 = vpop.f32.mrb[0].mxu0
      %v1714 = vadd.f32 %v1137, %v1713
      %v1715 = vpop.f32.mrb[0].mxu0
      %1716 = vdwg.mxu0
      %v1717 = vmax.f32 %v1399, 0.0
      %v1718 = vmax.f32 %v1404, 0.0
      %v1719 = vmax.f32 %v1409, 0.0
      %v1720 = vmax.f32 %v1414, 0.0
      %v1721 = vmax.f32 %v1419, 0.0
      %v1722 = vmax.f32 %v1424, 0.0
      %v1723 = vmax.f32 %v1429, 0.0
      %v1724 = vmax.f32 %v1434, 0.0
      %v1725 = vmax.f32 %v1439, 0.0
      %v1726 = vmax.f32 %v1444, 0.0
      %v1727 = vmax.f32 %v1449, 0.0
      %v1728 = vmax.f32 %v1454, 0.0
      %v1729 = vmax.f32 %v1459, 0.0
      %v1730 = vmax.f32 %v1464, 0.0
      %v1731 = vmax.f32 %v1469, 0.0
      %v1732 = vmax.f32 %v1474, 0.0
      %v1733 = vmax.f32 %v1479, 0.0
      %v1734 = vmax.f32 %v1484, 0.0
      %v1735 = vmax.f32 %v1489, 0.0
      %v1736 = vmax.f32 %v1494, 0.0
      %v1737 = vmax.f32 %v1499, 0.0
      %v1738 = vmax.f32 %v1504, 0.0
      %v1739 = vmax.f32 %v1509, 0.0
      %v1740 = vmax.f32 %v1514, 0.0
      %v1741 = vmax.f32 %v1519, 0.0
      %v1742 = vmax.f32 %v1524, 0.0
      %v1743 = vmax.f32 %v1529, 0.0
      %v1744 = vmax.f32 %v1534, 0.0
      %v1745 = vmax.f32 %v1539, 0.0
      %v1746 = vmax.f32 %v1544, 0.0
      %v1747 = vmax.f32 %v1549, 0.0
      %v1748 = vmax.f32 %v1554, 0.0
      %v1749 = vmax.f32 %v1559, 0.0
      %v1750 = vmax.f32 %v1564, 0.0
      %v1751 = vmax.f32 %v1569, 0.0
      %v1752 = vmax.f32 %v1574, 0.0
      %v1753 = vmax.f32 %v1579, 0.0
      %v1754 = vmax.f32 %v1584, 0.0
      %v1755 = vmax.f32 %v1589, 0.0
      %v1756 = vmax.f32 %v1594, 0.0
      %v1757 = vmax.f32 %v1599, 0.0
      %v1758 = vmax.f32 %v1604, 0.0
      %v1759 = vmax.f32 %v1609, 0.0
      %v1760 = vmax.f32 %v1614, 0.0
      %v1761 = vmax.f32 %v1619, 0.0
      %v1762 = vmax.f32 %v1624, 0.0
      %v1763 = vmax.f32 %v1629, 0.0
      %v1764 = vmax.f32 %v1634, 0.0
      %v1765 = vmax.f32 %v1639, 0.0
      %v1766 = vmax.f32 %v1644, 0.0
      %v1767 = vmax.f32 %v1649, 0.0
      %v1768 = vmax.f32 %v1654, 0.0
      %v1769 = vmax.f32 %v1659, 0.0
      %v1770 = vmax.f32 %v1664, 0.0
      %v1771 = vmax.f32 %v1669, 0.0
      %v1772 = vmax.f32 %v1674, 0.0
      %v1773 = vmax.f32 %v1679, 0.0
      %v1774 = vmax.f32 %v1684, 0.0
      %v1775 = vmax.f32 %v1689, 0.0
      %v1776 = vmax.f32 %v1694, 0.0
      %v1777 = vmax.f32 %v1699, 0.0
      %v1778 = vmax.f32 %v1704, 0.0
      %v1779 = vmax.f32 %v1709, 0.0
      %v1780 = vmax.f32 %v1714, 0.0
      %v1781 = vld [vmem:[%s7] sm:$0xff]
      %v1782 = vld [vmem:[%s7 + $0x8] sm:$0xff]
      %v1783 = vld [vmem:[%s7 + $0x10] sm:$0xff]
      %v1784 = vld [vmem:[%s7 + $0x18] sm:$0xff]
      %v1785 = vld [vmem:[%s7 + $0x20] sm:$0xff]
      %v1786 = vld [vmem:[%s7 + $0x28] sm:$0xff]
      %v1787 = vld [vmem:[%s7 + $0x30] sm:$0xff]
      %v1788 = vld [vmem:[%s7 + $0x38] sm:$0xff]
      %v1789 = vld [vmem:[%s8] sm:$0x1]
      %v1791 = vlaneseq
      %v1792 = vshrl.u32 %v1791, 7
      %v1793 = vsub.s32 0, %v1792
      %v1794 = vrot.slane %v1789, %v1793
      %vm1796 = vcmask 523264
      %v1798 = vsel %vm1796, %v1717, 0
      %v1801 = vsel %vm1796, %v1718, 0
      %v1804 = vsel %vm1796, %v1719, 0
      %v1807 = vsel %vm1796, %v1720, 0
      %v1810 = vsel %vm1796, %v1721, 0
      %v1813 = vsel %vm1796, %v1722, 0
      %v1816 = vsel %vm1796, %v1723, 0
      %v1819 = vsel %vm1796, %v1724, 0
      %v1822 = vsel %vm1796, %v1725, 0
      %v1825 = vsel %vm1796, %v1726, 0
      %v1828 = vsel %vm1796, %v1727, 0
      %v1831 = vsel %vm1796, %v1728, 0
      %v1834 = vsel %vm1796, %v1729, 0
      %v1837 = vsel %vm1796, %v1730, 0
      %v1840 = vsel %vm1796, %v1731, 0
      %v1843 = vsel %vm1796, %v1732, 0
      %v1846 = vsel %vm1796, %v1733, 0
      %v1849 = vsel %vm1796, %v1734, 0
      %v1852 = vsel %vm1796, %v1735, 0
      %v1855 = vsel %vm1796, %v1736, 0
      %v1858 = vsel %vm1796, %v1737, 0
      %v1861 = vsel %vm1796, %v1738, 0
      %v1864 = vsel %vm1796, %v1739, 0
      %v1867 = vsel %vm1796, %v1740, 0
      %v1870 = vsel %vm1796, %v1741, 0
      %v1873 = vsel %vm1796, %v1742, 0
      %v1876 = vsel %vm1796, %v1743, 0
      %v1879 = vsel %vm1796, %v1744, 0
      %v1882 = vsel %vm1796, %v1745, 0
      %v1885 = vsel %vm1796, %v1746, 0
      %v1888 = vsel %vm1796, %v1747, 0
      %v1891 = vsel %vm1796, %v1748, 0
      %v1894 = vsel %vm1796, %v1749, 0
      %v1897 = vsel %vm1796, %v1750, 0
      %v1900 = vsel %vm1796, %v1751, 0
      %v1903 = vsel %vm1796, %v1752, 0
      %v1906 = vsel %vm1796, %v1753, 0
      %v1909 = vsel %vm1796, %v1754, 0
      %v1912 = vsel %vm1796, %v1755, 0
      %v1915 = vsel %vm1796, %v1756, 0
      %v1918 = vsel %vm1796, %v1757, 0
      %v1921 = vsel %vm1796, %v1758, 0
      %v1924 = vsel %vm1796, %v1759, 0
      %v1927 = vsel %vm1796, %v1760, 0
      %v1930 = vsel %vm1796, %v1761, 0
      %v1933 = vsel %vm1796, %v1762, 0
      %v1936 = vsel %vm1796, %v1763, 0
      %v1939 = vsel %vm1796, %v1764, 0
      %v1942 = vsel %vm1796, %v1765, 0
      %v1945 = vsel %vm1796, %v1766, 0
      %v1948 = vsel %vm1796, %v1767, 0
      %v1951 = vsel %vm1796, %v1768, 0
      %v1954 = vsel %vm1796, %v1769, 0
      %v1957 = vsel %vm1796, %v1770, 0
      %v1960 = vsel %vm1796, %v1771, 0
      %v1963 = vsel %vm1796, %v1772, 0
      %v1966 = vsel %vm1796, %v1773, 0
      %v1969 = vsel %vm1796, %v1774, 0
      %v1972 = vsel %vm1796, %v1775, 0
      %v1975 = vsel %vm1796, %v1776, 0
      %v1978 = vsel %vm1796, %v1777, 0
      %v1981 = vsel %vm1796, %v1778, 0
      %v1984 = vsel %vm1796, %v1779, 0
      %v1987 = vsel %vm1796, %v1780, 0
      %1989 = vmatprep.subr.mxu0 0.0
      %1990 = vmatpush1.msra.mxu0 %v1781
      %1991 = vmatprep.subr.mxu0 0.0
      %1992 = vmatpush1.msra.mxu0 %v1782
      %1993 = vmatprep.subr.mxu0 0.0
      %1994 = vmatpush1.msra.mxu0 %v1783
      %1995 = vmatprep.subr.mxu0 0.0
      %1996 = vmatpush1.msra.mxu0 %v1784
      %1997 = vmatprep.subr.mxu0 0.0
      %1998 = vmatpush1.msra.mxu0 %v1785
      %1999 = vmatprep.subr.mxu0 0.0
      %2000 = vmatpush1.msra.mxu0 %v1786
      %2001 = vmatprep.subr.mxu0 0.0
      %2002 = vmatpush1.msra.mxu0 %v1787
      %2003 = vmatprep.subr.mxu0 0.0
      %2004 = vmatpush1.msra.mxu0 %v1788
      %2005 = vmatprep.subr.mxu0 0.0
      %2006 = vmatpush1.msra.mxu0 0.0
      %2007 = vmatprep.subr.mxu0 0.0
      %2008 = vmatpush1.msra.mxu0 0.0
      %2009 = vmatprep.subr.mxu0 0.0
      %2010 = vmatpush1.msra.mxu0 0.0
      %2011 = vmatprep.subr.mxu0 0.0
      %2012 = vmatpush1.msra.mxu0 0.0
      %2013 = vmatprep.subr.mxu0 0.0
      %2014 = vmatpush1.msra.mxu0 0.0
      %2015 = vmatprep.subr.mxu0 0.0
      %2016 = vmatpush1.msra.mxu0 0.0
      %2017 = vmatprep.subr.mxu0 0.0
      %2018 = vmatpush1.msra.mxu0 0.0
      %2019 = vmatprep.subr.mxu0 0.0
      %2020 = vmatpush1.msra.mxu0 0.0
      %2021 = vmatprep.subr.mxu0 0.0
      %2022 = vmatpush1.msra.mxu0 0.0
      %2023 = vmatprep.subr.mxu0 0.0
      %2024 = vmatpush1.msra.mxu0 0.0
      %2025 = vmatprep.subr.mxu0 0.0
      %2026 = vmatpush1.msra.mxu0 0.0
      %2027 = vmatprep.subr.mxu0 0.0
      %2028 = vmatpush1.msra.mxu0 0.0
      %2029 = vmatprep.subr.mxu0 0.0
      %2030 = vmatpush1.msra.mxu0 0.0
      %2031 = vmatprep.subr.mxu0 0.0
      %2032 = vmatpush1.msra.mxu0 0.0
      %2033 = vmatprep.subr.mxu0 0.0
      %2034 = vmatpush1.msra.mxu0 0.0
      %2035 = vmatprep.subr.mxu0 0.0
      %2036 = vmatpush1.msra.mxu0 0.0
      %2037 = vmatprep.subr.mxu0 0.0
      %2038 = vmatpush1.msra.mxu0 0.0
      %2039 = vmatprep.subr.mxu0 0.0
      %2040 = vmatpush1.msra.mxu0 0.0
      %2041 = vmatprep.subr.mxu0 0.0
      %2042 = vmatpush1.msra.mxu0 0.0
      %2043 = vmatprep.subr.mxu0 0.0
      %2044 = vmatpush1.msra.mxu0 0.0
      %2045 = vmatprep.subr.mxu0 0.0
      %2046 = vmatpush1.msra.mxu0 0.0
      %2047 = vmatprep.subr.mxu0 0.0
      %2048 = vmatpush1.msra.mxu0 0.0
      %2049 = vmatprep.subr.mxu0 0.0
      %2050 = vmatpush1.msra.mxu0 0.0
      %2051 = vmatprep.subr.mxu0 0.0
      %2052 = vmatpush1.msra.mxu0 0.0
      %2053 = vmatprep.mubr.f32.mxu0 0.0
      %2054 = vmatmul.mubr.f32.gmra.mrb[0].mxu0 %v1798
      %v2055 = vpop.f32.mrb[0].mxu0
      %v2056 = vadd.f32 %v1794, %v2055
      %v2057 = vpop.f32.mrb[0].mxu0
      %2058 = vmatprep.mubr.f32.mxu0 0.0
      %2059 = vmatmul.mubr.f32.gmra.mrb[0].mxu0 %v1801
      %v2060 = vpop.f32.mrb[0].mxu0
      %v2061 = vadd.f32 %v1794, %v2060
      %v2062 = vpop.f32.mrb[0].mxu0
      %2063 = vmatprep.mubr.f32.mxu0 0.0
      %2064 = vmatmul.mubr.f32.gmra.mrb[0].mxu0 %v1804
      %v2065 = vpop.f32.mrb[0].mxu0
      %v2066 = vadd.f32 %v1794, %v2065
      %v2067 = vpop.f32.mrb[0].mxu0
      %2068 = vmatprep.mubr.f32.mxu0 0.0
      %2069 = vmatmul.mubr.f32.gmra.mrb[0].mxu0 %v1807
      %v2070 = vpop.f32.mrb[0].mxu0
      %v2071 = vadd.f32 %v1794, %v2070
      %v2072 = vpop.f32.mrb[0].mxu0
      %2073 = vmatprep.mubr.f32.mxu0 0.0
      %2074 = vmatmul.mubr.f32.gmra.mrb[0].mxu0 %v1810
      %v2075 = vpop.f32.mrb[0].mxu0
      %v2076 = vadd.f32 %v1794, %v2075
      %v2077 = vpop.f32.mrb[0].mxu0
      %2078 = vmatprep.mubr.f32.mxu0 0.0
      %2079 = vmatmul.mubr.f32.gmra.mrb[0].mxu0 %v1813
      %v2080 = vpop.f32.mrb[0].mxu0
      %v2081 = vadd.f32 %v1794, %v2080
      %v2082 = vpop.f32.mrb[0].mxu0
      %2083 = vmatprep.mubr.f32.mxu0 0.0
      %2084 = vmatmul.mubr.f32.gmra.mrb[0].mxu0 %v1816
      %v2085 = vpop.f32.mrb[0].mxu0
      %v2086 = vadd.f32 %v1794, %v2085
      %v2087 = vpop.f32.mrb[0].mxu0
      %2088 = vmatprep.mubr.f32.mxu0 0.0
      %2089 = vmatmul.mubr.f32.gmra.mrb[0].mxu0 %v1819
      %v2090 = vpop.f32.mrb[0].mxu0
      %v2091 = vadd.f32 %v1794, %v2090
      %v2092 = vpop.f32.mrb[0].mxu0
      %2093 = vmatprep.mubr.f32.mxu0 0.0
      %2094 = vmatmul.mubr.f32.gmra.mrb[0].mxu0 %v1822
      %v2095 = vpop.f32.mrb[0].mxu0
      %v2096 = vadd.f32 %v1794, %v2095
      %v2097 = vpop.f32.mrb[0].mxu0
      %2098 = vmatprep.mubr.f32.mxu0 0.0
      %2099 = vmatmul.mubr.f32.gmra.mrb[0].mxu0 %v1825
      %v2100 = vpop.f32.mrb[0].mxu0
      %v2101 = vadd.f32 %v1794, %v2100
      %v2102 = vpop.f32.mrb[0].mxu0
      %2103 = vmatprep.mubr.f32.mxu0 0.0
      %2104 = vmatmul.mubr.f32.gmra.mrb[0].mxu0 %v1828
      %v2105 = vpop.f32.mrb[0].mxu0
      %v2106 = vadd.f32 %v1794, %v2105
      %v2107 = vpop.f32.mrb[0].mxu0
      %2108 = vmatprep.mubr.f32.mxu0 0.0
      %2109 = vmatmul.mubr.f32.gmra.mrb[0].mxu0 %v1831
      %v2110 = vpop.f32.mrb[0].mxu0
      %v2111 = vadd.f32 %v1794, %v2110
      %v2112 = vpop.f32.mrb[0].mxu0
      %2113 = vmatprep.mubr.f32.mxu0 0.0
      %2114 = vmatmul.mubr.f32.gmra.mrb[0].mxu0 %v1834
      %v2115 = vpop.f32.mrb[0].mxu0
      %v2116 = vadd.f32 %v1794, %v2115
      %v2117 = vpop.f32.mrb[0].mxu0
      %2118 = vmatprep.mubr.f32.mxu0 0.0
      %2119 = vmatmul.mubr.f32.gmra.mrb[0].mxu0 %v1837
      %v2120 = vpop.f32.mrb[0].mxu0
      %v2121 = vadd.f32 %v1794, %v2120
      %v2122 = vpop.f32.mrb[0].mxu0
      %2123 = vmatprep.mubr.f32.mxu0 0.0
      %2124 = vmatmul.mubr.f32.gmra.mrb[0].mxu0 %v1840
      %v2125 = vpop.f32.mrb[0].mxu0
      %v2126 = vadd.f32 %v1794, %v2125
      %v2127 = vpop.f32.mrb[0].mxu0
      %2128 = vmatprep.mubr.f32.mxu0 0.0
      %2129 = vmatmul.mubr.f32.gmra.mrb[0].mxu0 %v1843
      %v2130 = vpop.f32.mrb[0].mxu0
      %v2131 = vadd.f32 %v1794, %v2130
      %v2132 = vpop.f32.mrb[0].mxu0
      %2133 = vmatprep.mubr.f32.mxu0 0.0
      %2134 = vmatmul.mubr.f32.gmra.mrb[0].mxu0 %v1846
      %v2135 = vpop.f32.mrb[0].mxu0
      %v2136 = vadd.f32 %v1794, %v2135
      %v2137 = vpop.f32.mrb[0].mxu0
      %2138 = vmatprep.mubr.f32.mxu0 0.0
      %2139 = vmatmul.mubr.f32.gmra.mrb[0].mxu0 %v1849
      %v2140 = vpop.f32.mrb[0].mxu0
      %v2141 = vadd.f32 %v1794, %v2140
      %v2142 = vpop.f32.mrb[0].mxu0
      %2143 = vmatprep.mubr.f32.mxu0 0.0
      %2144 = vmatmul.mubr.f32.gmra.mrb[0].mxu0 %v1852
      %v2145 = vpop.f32.mrb[0].mxu0
      %v2146 = vadd.f32 %v1794, %v2145
      %v2147 = vpop.f32.mrb[0].mxu0
      %2148 = vmatprep.mubr.f32.mxu0 0.0
      %2149 = vmatmul.mubr.f32.gmra.mrb[0].mxu0 %v1855
      %v2150 = vpop.f32.mrb[0].mxu0
      %v2151 = vadd.f32 %v1794, %v2150
      %v2152 = vpop.f32.mrb[0].mxu0
      %2153 = vmatprep.mubr.f32.mxu0 0.0
      %2154 = vmatmul.mubr.f32.gmra.mrb[0].mxu0 %v1858
      %v2155 = vpop.f32.mrb[0].mxu0
      %v2156 = vadd.f32 %v1794, %v2155
      %v2157 = vpop.f32.mrb[0].mxu0
      %2158 = vmatprep.mubr.f32.mxu0 0.0
      %2159 = vmatmul.mubr.f32.gmra.mrb[0].mxu0 %v1861
      %v2160 = vpop.f32.mrb[0].mxu0
      %v2161 = vadd.f32 %v1794, %v2160
      %v2162 = vpop.f32.mrb[0].mxu0
      %2163 = vmatprep.mubr.f32.mxu0 0.0
      %2164 = vmatmul.mubr.f32.gmra.mrb[0].mxu0 %v1864
      %v2165 = vpop.f32.mrb[0].mxu0
      %v2166 = vadd.f32 %v1794, %v2165
      %v2167 = vpop.f32.mrb[0].mxu0
      %2168 = vmatprep.mubr.f32.mxu0 0.0
      %2169 = vmatmul.mubr.f32.gmra.mrb[0].mxu0 %v1867
      %v2170 = vpop.f32.mrb[0].mxu0
      %v2171 = vadd.f32 %v1794, %v2170
      %v2172 = vpop.f32.mrb[0].mxu0
      %2173 = vmatprep.mubr.f32.mxu0 0.0
      %2174 = vmatmul.mubr.f32.gmra.mrb[0].mxu0 %v1870
      %v2175 = vpop.f32.mrb[0].mxu0
      %v2176 = vadd.f32 %v1794, %v2175
      %v2177 = vpop.f32.mrb[0].mxu0
      %2178 = vmatprep.mubr.f32.mxu0 0.0
      %2179 = vmatmul.mubr.f32.gmra.mrb[0].mxu0 %v1873
      %v2180 = vpop.f32.mrb[0].mxu0
      %v2181 = vadd.f32 %v1794, %v2180
      %v2182 = vpop.f32.mrb[0].mxu0
      %2183 = vmatprep.mubr.f32.mxu0 0.0
      %2184 = vmatmul.mubr.f32.gmra.mrb[0].mxu0 %v1876
      %v2185 = vpop.f32.mrb[0].mxu0
      %v2186 = vadd.f32 %v1794, %v2185
      %v2187 = vpop.f32.mrb[0].mxu0
      %2188 = vmatprep.mubr.f32.mxu0 0.0
      %2189 = vmatmul.mubr.f32.gmra.mrb[0].mxu0 %v1879
      %v2190 = vpop.f32.mrb[0].mxu0
      %v2191 = vadd.f32 %v1794, %v2190
      %v2192 = vpop.f32.mrb[0].mxu0
      %2193 = vmatprep.mubr.f32.mxu0 0.0
      %2194 = vmatmul.mubr.f32.gmra.mrb[0].mxu0 %v1882
      %v2195 = vpop.f32.mrb[0].mxu0
      %v2196 = vadd.f32 %v1794, %v2195
      %v2197 = vpop.f32.mrb[0].mxu0
      %2198 = vmatprep.mubr.f32.mxu0 0.0
      %2199 = vmatmul.mubr.f32.gmra.mrb[0].mxu0 %v1885
      %v2200 = vpop.f32.mrb[0].mxu0
      %v2201 = vadd.f32 %v1794, %v2200
      %v2202 = vpop.f32.mrb[0].mxu0
      %2203 = vmatprep.mubr.f32.mxu0 0.0
      %2204 = vmatmul.mubr.f32.gmra.mrb[0].mxu0 %v1888
      %v2205 = vpop.f32.mrb[0].mxu0
      %v2206 = vadd.f32 %v1794, %v2205
      %v2207 = vpop.f32.mrb[0].mxu0
      %2208 = vmatprep.mubr.f32.mxu0 0.0
      %2209 = vmatmul.mubr.f32.gmra.mrb[0].mxu0 %v1891
      %v2210 = vpop.f32.mrb[0].mxu0
      %v2211 = vadd.f32 %v1794, %v2210
      %v2212 = vpop.f32.mrb[0].mxu0
      %2213 = vmatprep.mubr.f32.mxu0 0.0
      %2214 = vmatmul.mubr.f32.gmra.mrb[0].mxu0 %v1894
      %v2215 = vpop.f32.mrb[0].mxu0
      %v2216 = vadd.f32 %v1794, %v2215
      %v2217 = vpop.f32.mrb[0].mxu0
      %2218 = vmatprep.mubr.f32.mxu0 0.0
      %2219 = vmatmul.mubr.f32.gmra.mrb[0].mxu0 %v1897
      %v2220 = vpop.f32.mrb[0].mxu0
      %v2221 = vadd.f32 %v1794, %v2220
      %v2222 = vpop.f32.mrb[0].mxu0
      %2223 = vmatprep.mubr.f32.mxu0 0.0
      %2224 = vmatmul.mubr.f32.gmra.mrb[0].mxu0 %v1900
      %v2225 = vpop.f32.mrb[0].mxu0
      %v2226 = vadd.f32 %v1794, %v2225
      %v2227 = vpop.f32.mrb[0].mxu0
      %2228 = vmatprep.mubr.f32.mxu0 0.0
      %2229 = vmatmul.mubr.f32.gmra.mrb[0].mxu0 %v1903
      %v2230 = vpop.f32.mrb[0].mxu0
      %v2231 = vadd.f32 %v1794, %v2230
      %v2232 = vpop.f32.mrb[0].mxu0
      %2233 = vmatprep.mubr.f32.mxu0 0.0
      %2234 = vmatmul.mubr.f32.gmra.mrb[0].mxu0 %v1906
      %v2235 = vpop.f32.mrb[0].mxu0
      %v2236 = vadd.f32 %v1794, %v2235
      %v2237 = vpop.f32.mrb[0].mxu0
      %2238 = vmatprep.mubr.f32.mxu0 0.0
      %2239 = vmatmul.mubr.f32.gmra.mrb[0].mxu0 %v1909
      %v2240 = vpop.f32.mrb[0].mxu0
      %v2241 = vadd.f32 %v1794, %v2240
      %v2242 = vpop.f32.mrb[0].mxu0
      %2243 = vmatprep.mubr.f32.mxu0 0.0
      %2244 = vmatmul.mubr.f32.gmra.mrb[0].mxu0 %v1912
      %v2245 = vpop.f32.mrb[0].mxu0
      %v2246 = vadd.f32 %v1794, %v2245
      %v2247 = vpop.f32.mrb[0].mxu0
      %2248 = vmatprep.mubr.f32.mxu0 0.0
      %2249 = vmatmul.mubr.f32.gmra.mrb[0].mxu0 %v1915
      %v2250 = vpop.f32.mrb[0].mxu0
      %v2251 = vadd.f32 %v1794, %v2250
      %v2252 = vpop.f32.mrb[0].mxu0
      %2253 = vmatprep.mubr.f32.mxu0 0.0
      %2254 = vmatmul.mubr.f32.gmra.mrb[0].mxu0 %v1918
      %v2255 = vpop.f32.mrb[0].mxu0
      %v2256 = vadd.f32 %v1794, %v2255
      %v2257 = vpop.f32.mrb[0].mxu0
      %2258 = vmatprep.mubr.f32.mxu0 0.0
      %2259 = vmatmul.mubr.f32.gmra.mrb[0].mxu0 %v1921
      %v2260 = vpop.f32.mrb[0].mxu0
      %v2261 = vadd.f32 %v1794, %v2260
      %v2262 = vpop.f32.mrb[0].mxu0
      %2263 = vmatprep.mubr.f32.mxu0 0.0
      %2264 = vmatmul.mubr.f32.gmra.mrb[0].mxu0 %v1924
      %v2265 = vpop.f32.mrb[0].mxu0
      %v2266 = vadd.f32 %v1794, %v2265
      %v2267 = vpop.f32.mrb[0].mxu0
      %2268 = vmatprep.mubr.f32.mxu0 0.0
      %2269 = vmatmul.mubr.f32.gmra.mrb[0].mxu0 %v1927
      %v2270 = vpop.f32.mrb[0].mxu0
      %v2271 = vadd.f32 %v1794, %v2270
      %v2272 = vpop.f32.mrb[0].mxu0
      %2273 = vmatprep.mubr.f32.mxu0 0.0
      %2274 = vmatmul.mubr.f32.gmra.mrb[0].mxu0 %v1930
      %v2275 = vpop.f32.mrb[0].mxu0
      %v2276 = vadd.f32 %v1794, %v2275
      %v2277 = vpop.f32.mrb[0].mxu0
      %2278 = vmatprep.mubr.f32.mxu0 0.0
      %2279 = vmatmul.mubr.f32.gmra.mrb[0].mxu0 %v1933
      %v2280 = vpop.f32.mrb[0].mxu0
      %v2281 = vadd.f32 %v1794, %v2280
      %v2282 = vpop.f32.mrb[0].mxu0
      %2283 = vmatprep.mubr.f32.mxu0 0.0
      %2284 = vmatmul.mubr.f32.gmra.mrb[0].mxu0 %v1936
      %v2285 = vpop.f32.mrb[0].mxu0
      %v2286 = vadd.f32 %v1794, %v2285
      %v2287 = vpop.f32.mrb[0].mxu0
      %2288 = vmatprep.mubr.f32.mxu0 0.0
      %2289 = vmatmul.mubr.f32.gmra.mrb[0].mxu0 %v1939
      %v2290 = vpop.f32.mrb[0].mxu0
      %v2291 = vadd.f32 %v1794, %v2290
      %v2292 = vpop.f32.mrb[0].mxu0
      %2293 = vmatprep.mubr.f32.mxu0 0.0
      %2294 = vmatmul.mubr.f32.gmra.mrb[0].mxu0 %v1942
      %v2295 = vpop.f32.mrb[0].mxu0
      %v2296 = vadd.f32 %v1794, %v2295
      %v2297 = vpop.f32.mrb[0].mxu0
      %2298 = vmatprep.mubr.f32.mxu0 0.0
      %2299 = vmatmul.mubr.f32.gmra.mrb[0].mxu0 %v1945
      %v2300 = vpop.f32.mrb[0].mxu0
      %v2301 = vadd.f32 %v1794, %v2300
      %v2302 = vpop.f32.mrb[0].mxu0
      %2303 = vmatprep.mubr.f32.mxu0 0.0
      %2304 = vmatmul.mubr.f32.gmra.mrb[0].mxu0 %v1948
      %v2305 = vpop.f32.mrb[0].mxu0
      %v2306 = vadd.f32 %v1794, %v2305
      %v2307 = vpop.f32.mrb[0].mxu0
      %2308 = vmatprep.mubr.f32.mxu0 0.0
      %2309 = vmatmul.mubr.f32.gmra.mrb[0].mxu0 %v1951
      %v2310 = vpop.f32.mrb[0].mxu0
      %v2311 = vadd.f32 %v1794, %v2310
      %v2312 = vpop.f32.mrb[0].mxu0
      %2313 = vmatprep.mubr.f32.mxu0 0.0
      %2314 = vmatmul.mubr.f32.gmra.mrb[0].mxu0 %v1954
      %v2315 = vpop.f32.mrb[0].mxu0
      %v2316 = vadd.f32 %v1794, %v2315
      %v2317 = vpop.f32.mrb[0].mxu0
      %2318 = vmatprep.mubr.f32.mxu0 0.0
      %2319 = vmatmul.mubr.f32.gmra.mrb[0].mxu0 %v1957
      %v2320 = vpop.f32.mrb[0].mxu0
      %v2321 = vadd.f32 %v1794, %v2320
      %v2322 = vpop.f32.mrb[0].mxu0
      %2323 = vmatprep.mubr.f32.mxu0 0.0
      %2324 = vmatmul.mubr.f32.gmra.mrb[0].mxu0 %v1960
      %v2325 = vpop.f32.mrb[0].mxu0
      %v2326 = vadd.f32 %v1794, %v2325
      %v2327 = vpop.f32.mrb[0].mxu0
      %2328 = vmatprep.mubr.f32.mxu0 0.0
      %2329 = vmatmul.mubr.f32.gmra.mrb[0].mxu0 %v1963
      %v2330 = vpop.f32.mrb[0].mxu0
      %v2331 = vadd.f32 %v1794, %v2330
      %v2332 = vpop.f32.mrb[0].mxu0
      %2333 = vmatprep.mubr.f32.mxu0 0.0
      %2334 = vmatmul.mubr.f32.gmra.mrb[0].mxu0 %v1966
      %v2335 = vpop.f32.mrb[0].mxu0
      %v2336 = vadd.f32 %v1794, %v2335
      %v2337 = vpop.f32.mrb[0].mxu0
      %2338 = vmatprep.mubr.f32.mxu0 0.0
      %2339 = vmatmul.mubr.f32.gmra.mrb[0].mxu0 %v1969
      %v2340 = vpop.f32.mrb[0].mxu0
      %v2341 = vadd.f32 %v1794, %v2340
      %v2342 = vpop.f32.mrb[0].mxu0
      %2343 = vmatprep.mubr.f32.mxu0 0.0
      %2344 = vmatmul.mubr.f32.gmra.mrb[0].mxu0 %v1972
      %v2345 = vpop.f32.mrb[0].mxu0
      %v2346 = vadd.f32 %v1794, %v2345
      %v2347 = vpop.f32.mrb[0].mxu0
      %2348 = vmatprep.mubr.f32.mxu0 0.0
      %2349 = vmatmul.mubr.f32.gmra.mrb[0].mxu0 %v1975
      %v2350 = vpop.f32.mrb[0].mxu0
      %v2351 = vadd.f32 %v1794, %v2350
      %v2352 = vpop.f32.mrb[0].mxu0
      %2353 = vmatprep.mubr.f32.mxu0 0.0
      %2354 = vmatmul.mubr.f32.gmra.mrb[0].mxu0 %v1978
      %v2355 = vpop.f32.mrb[0].mxu0
      %v2356 = vadd.f32 %v1794, %v2355
      %v2357 = vpop.f32.mrb[0].mxu0
      %2358 = vmatprep.mubr.f32.mxu0 0.0
      %2359 = vmatmul.mubr.f32.gmra.mrb[0].mxu0 %v1981
      %v2360 = vpop.f32.mrb[0].mxu0
      %v2361 = vadd.f32 %v1794, %v2360
      %v2362 = vpop.f32.mrb[0].mxu0
      %2363 = vmatprep.mubr.f32.mxu0 0.0
      %2364 = vmatmul.mubr.f32.gmra.mrb[0].mxu0 %v1984
      %v2365 = vpop.f32.mrb[0].mxu0
      %v2366 = vadd.f32 %v1794, %v2365
      %v2367 = vpop.f32.mrb[0].mxu0
      %2368 = vmatprep.mubr.f32.mxu0 0.0
      %2369 = vmatmul.mubr.f32.gmra.mrb[0].mxu0 %v1987
      %v2370 = vpop.f32.mrb[0].mxu0
      %v2371 = vadd.f32 %v1794, %v2370
      %v2372 = vpop.f32.mrb[0].mxu0
      %2373 = vdwg.mxu0
      %v2374 = vmax.f32 %v2056, 0.0
      %v2375 = vmax.f32 %v2061, 0.0
      %v2376 = vmax.f32 %v2066, 0.0
      %v2377 = vmax.f32 %v2071, 0.0
      %v2378 = vmax.f32 %v2076, 0.0
      %v2379 = vmax.f32 %v2081, 0.0
      %v2380 = vmax.f32 %v2086, 0.0
      %v2381 = vmax.f32 %v2091, 0.0
      %v2382 = vmax.f32 %v2096, 0.0
      %v2383 = vmax.f32 %v2101, 0.0
      %v2384 = vmax.f32 %v2106, 0.0
      %v2385 = vmax.f32 %v2111, 0.0
      %v2386 = vmax.f32 %v2116, 0.0
      %v2387 = vmax.f32 %v2121, 0.0
      %v2388 = vmax.f32 %v2126, 0.0
      %v2389 = vmax.f32 %v2131, 0.0
      %v2390 = vmax.f32 %v2136, 0.0
      %v2391 = vmax.f32 %v2141, 0.0
      %v2392 = vmax.f32 %v2146, 0.0
      %v2393 = vmax.f32 %v2151, 0.0
      %v2394 = vmax.f32 %v2156, 0.0
      %v2395 = vmax.f32 %v2161, 0.0
      %v2396 = vmax.f32 %v2166, 0.0
      %v2397 = vmax.f32 %v2171, 0.0
      %v2398 = vmax.f32 %v2176, 0.0
      %v2399 = vmax.f32 %v2181, 0.0
      %v2400 = vmax.f32 %v2186, 0.0
      %v2401 = vmax.f32 %v2191, 0.0
      %v2402 = vmax.f32 %v2196, 0.0
      %v2403 = vmax.f32 %v2201, 0.0
      %v2404 = vmax.f32 %v2206, 0.0
      %v2405 = vmax.f32 %v2211, 0.0
      %v2406 = vmax.f32 %v2216, 0.0
      %v2407 = vmax.f32 %v2221, 0.0
      %v2408 = vmax.f32 %v2226, 0.0
      %v2409 = vmax.f32 %v2231, 0.0
      %v2410 = vmax.f32 %v2236, 0.0
      %v2411 = vmax.f32 %v2241, 0.0
      %v2412 = vmax.f32 %v2246, 0.0
      %v2413 = vmax.f32 %v2251, 0.0
      %v2414 = vmax.f32 %v2256, 0.0
      %v2415 = vmax.f32 %v2261, 0.0
      %v2416 = vmax.f32 %v2266, 0.0
      %v2417 = vmax.f32 %v2271, 0.0
      %v2418 = vmax.f32 %v2276, 0.0
      %v2419 = vmax.f32 %v2281, 0.0
      %v2420 = vmax.f32 %v2286, 0.0
      %v2421 = vmax.f32 %v2291, 0.0
      %v2422 = vmax.f32 %v2296, 0.0
      %v2423 = vmax.f32 %v2301, 0.0
      %v2424 = vmax.f32 %v2306, 0.0
      %v2425 = vmax.f32 %v2311, 0.0
      %v2426 = vmax.f32 %v2316, 0.0
      %v2427 = vmax.f32 %v2321, 0.0
      %v2428 = vmax.f32 %v2326, 0.0
      %v2429 = vmax.f32 %v2331, 0.0
      %v2430 = vmax.f32 %v2336, 0.0
      %v2431 = vmax.f32 %v2341, 0.0
      %v2432 = vmax.f32 %v2346, 0.0
      %v2433 = vmax.f32 %v2351, 0.0
      %v2434 = vmax.f32 %v2356, 0.0
      %v2435 = vmax.f32 %v2361, 0.0
      %v2436 = vmax.f32 %v2366, 0.0
      %v2437 = vmax.f32 %v2371, 0.0
      %v2438 = vlaneseq
      %v2439 = vshrl.u32 %v2438, 7
      %v2440 = vld [vmem:[%s382] sm:$0xf]
      %v2441 = vlaneseq
      %v2442 = vshrl.u32 %v2441, 7
      %v2443 = vsub.s32 0, %v2442
      %v2444 = vrot.slane %v2440, %v2443
      %v2445 = vlaneseq
      %v2446 = vshrl.u32 %v2445, 7
      %v2447 = vsub.s32 1, %v2446
      %v2448 = vrot.slane %v2440, %v2447
      %v2449 = vlaneseq
      %v2450 = vshrl.u32 %v2449, 7
      %v2451 = vsub.s32 2, %v2450
      %v2452 = vrot.slane %v2440, %v2451
      %v2453 = vlaneseq
      %v2454 = vshrl.u32 %v2453, 7
      %v2455 = vsub.s32 3, %v2454
      %v2456 = vrot.slane %v2440, %v2455
      %vm2457 = vcmp.eq.s32.totalorder %v2444, %v2439
      %vm2458 = vcmp.eq.s32.totalorder %v2448, %v2439
      %vm2459 = vcmp.eq.s32.totalorder %v2452, %v2439
      %vm2460 = vcmp.eq.s32.totalorder %v2456, %v2439
      %v2461 = vld [vmem:[%s389] sm:$0xf]
      %v2463 = vlaneseq
      %v2464 = vshrl.u32 %v2463, 7
      %v2465 = vsub.s32 0, %v2464
      %v2466 = vrot.slane %v2461, %v2465
      %v2467 = vlaneseq
      %v2468 = vshrl.u32 %v2467, 7
      %v2469 = vsub.s32 1, %v2468
      %v2470 = vrot.slane %v2461, %v2469
      %v2471 = vlaneseq
      %v2472 = vshrl.u32 %v2471, 7
      %v2473 = vsub.s32 2, %v2472
      %v2474 = vrot.slane %v2461, %v2473
      %v2475 = vlaneseq
      %v2476 = vshrl.u32 %v2475, 7
      %v2477 = vsub.s32 3, %v2476
      %v2478 = vrot.slane %v2461, %v2477
      %v2483 = vsel %vm2457, %v2466, 0.0
      %v2484 = vsel %vm2458, %v2470, 0.0
      %v2485 = vsel %vm2459, %v2474, 0.0
      %v2486 = vsel %vm2460, %v2478, 0.0
      %v2487 = vld [vmem:[#allocation2] sm:$0xff]
      %2488 = vmatprep.subr.mxu0 0.0
      %2489 = vmatpush1.msra.mxu0 %v2374
      %2490 = vmatprep.subr.mxu0 0.0
      %2491 = vmatpush1.msra.mxu0 %v2375
      %2492 = vmatprep.subr.mxu0 0.0
      %2493 = vmatpush1.msra.mxu0 %v2376
      %2494 = vmatprep.subr.mxu0 0.0
      %2495 = vmatpush1.msra.mxu0 %v2377
      %2496 = vmatprep.subr.mxu0 0.0
      %2497 = vmatpush1.msra.mxu0 %v2378
      %2498 = vmatprep.subr.mxu0 0.0
      %2499 = vmatpush1.msra.mxu0 %v2379
      %2500 = vmatprep.subr.mxu0 0.0
      %2501 = vmatpush1.msra.mxu0 %v2380
      %2502 = vmatprep.subr.mxu0 0.0
      %2503 = vmatpush1.msra.mxu0 %v2381
      %2504 = vmatprep.subr.mxu0 0.0
      %2505 = vmatpush1.msra.mxu0 %v2382
      %2506 = vmatprep.subr.mxu0 0.0
      %2507 = vmatpush1.msra.mxu0 %v2383
      %2508 = vmatprep.subr.mxu0 0.0
      %2509 = vmatpush1.msra.mxu0 %v2384
      %2510 = vmatprep.subr.mxu0 0.0
      %2511 = vmatpush1.msra.mxu0 %v2385
      %2512 = vmatprep.subr.mxu0 0.0
      %2513 = vmatpush1.msra.mxu0 %v2386
      %2514 = vmatprep.subr.mxu0 0.0
      %2515 = vmatpush1.msra.mxu0 %v2387
      %2516 = vmatprep.subr.mxu0 0.0
      %2517 = vmatpush1.msra.mxu0 %v2388
      %2518 = vmatprep.subr.mxu0 0.0
      %2519 = vmatpush1.msra.mxu0 %v2389
      %2520 = vmatprep.subr.mxu0 0.0
      %2521 = vmatpush1.msra.mxu0 %v2390
      %2522 = vmatprep.subr.mxu0 0.0
      %2523 = vmatpush1.msra.mxu0 %v2391
      %2524 = vmatprep.subr.mxu0 0.0
      %2525 = vmatpush1.msra.mxu0 %v2392
      %2526 = vmatprep.subr.mxu0 0.0
      %2527 = vmatpush1.msra.mxu0 %v2393
      %2528 = vmatprep.subr.mxu0 0.0
      %2529 = vmatpush1.msra.mxu0 %v2394
      %2530 = vmatprep.subr.mxu0 0.0
      %2531 = vmatpush1.msra.mxu0 %v2395
      %2532 = vmatprep.subr.mxu0 0.0
      %2533 = vmatpush1.msra.mxu0 %v2396
      %2534 = vmatprep.subr.mxu0 0.0
      %2535 = vmatpush1.msra.mxu0 %v2397
      %2536 = vmatprep.subr.mxu0 0.0
      %2537 = vmatpush1.msra.mxu0 %v2398
      %2538 = vmatprep.subr.mxu0 0.0
      %2539 = vmatpush1.msra.mxu0 %v2399
      %2540 = vmatprep.subr.mxu0 0.0
      %2541 = vmatpush1.msra.mxu0 %v2400
      %2542 = vmatprep.subr.mxu0 0.0
      %2543 = vmatpush1.msra.mxu0 %v2401
      %2544 = vmatprep.subr.mxu0 0.0
      %2545 = vmatpush1.msra.mxu0 %v2402
      %2546 = vmatprep.subr.mxu0 0.0
      %2547 = vmatpush1.msra.mxu0 %v2403
      %2548 = vmatprep.subr.mxu0 0.0
      %2549 = vmatpush1.msra.mxu0 %v2404
      %2550 = vmatprep.subr.mxu0 0.0
      %2551 = vmatpush1.msra.mxu0 %v2405
      %2552 = vmatprep.mubr.f32.mxu0 %v2484
      %2553 = vmatmul.mubr.f32.gmra.mrb[0].mxu0 %v2483
      %v2554 = vpop.f32.mrb[0].mxu0
      %v2555 = vadd.f32 0.0, %v2554
      %v2556 = vpop.f32.mrb[0].mxu0
      %2557 = vdwg.mxu0
      %2558 = vmatprep.subr.mxu0 0.0
      %2559 = vmatpush1.msra.mxu0 %v2406
      %2560 = vmatprep.subr.mxu0 0.0
      %2561 = vmatpush1.msra.mxu0 %v2407
      %2562 = vmatprep.subr.mxu0 0.0
      %2563 = vmatpush1.msra.mxu0 %v2408
      %2564 = vmatprep.subr.mxu0 0.0
      %2565 = vmatpush1.msra.mxu0 %v2409
      %2566 = vmatprep.subr.mxu0 0.0
      %2567 = vmatpush1.msra.mxu0 %v2410
      %2568 = vmatprep.subr.mxu0 0.0
      %2569 = vmatpush1.msra.mxu0 %v2411
      %2570 = vmatprep.subr.mxu0 0.0
      %2571 = vmatpush1.msra.mxu0 %v2412
      %2572 = vmatprep.subr.mxu0 0.0
      %2573 = vmatpush1.msra.mxu0 %v2413
      %2574 = vmatprep.subr.mxu0 0.0
      %2575 = vmatpush1.msra.mxu0 %v2414
      %2576 = vmatprep.subr.mxu0 0.0
      %2577 = vmatpush1.msra.mxu0 %v2415
      %2578 = vmatprep.subr.mxu0 0.0
      %2579 = vmatpush1.msra.mxu0 %v2416
      %2580 = vmatprep.subr.mxu0 0.0
      %2581 = vmatpush1.msra.mxu0 %v2417
      %2582 = vmatprep.subr.mxu0 0.0
      %2583 = vmatpush1.msra.mxu0 %v2418
      %2584 = vmatprep.subr.mxu0 0.0
      %2585 = vmatpush1.msra.mxu0 %v2419
      %2586 = vmatprep.subr.mxu0 0.0
      %2587 = vmatpush1.msra.mxu0 %v2420
      %2588 = vmatprep.subr.mxu0 0.0
      %2589 = vmatpush1.msra.mxu0 %v2421
      %2590 = vmatprep.subr.mxu0 0.0
      %2591 = vmatpush1.msra.mxu0 %v2422
      %2592 = vmatprep.subr.mxu0 0.0
      %2593 = vmatpush1.msra.mxu0 %v2423
      %2594 = vmatprep.subr.mxu0 0.0
      %2595 = vmatpush1.msra.mxu0 %v2424
      %2596 = vmatprep.subr.mxu0 0.0
      %2597 = vmatpush1.msra.mxu0 %v2425
      %2598 = vmatprep.subr.mxu0 0.0
      %2599 = vmatpush1.msra.mxu0 %v2426
      %2600 = vmatprep.subr.mxu0 0.0
      %2601 = vmatpush1.msra.mxu0 %v2427
      %2602 = vmatprep.subr.mxu0 0.0
      %2603 = vmatpush1.msra.mxu0 %v2428
      %2604 = vmatprep.subr.mxu0 0.0
      %2605 = vmatpush1.msra.mxu0 %v2429
      %2606 = vmatprep.subr.mxu0 0.0
      %2607 = vmatpush1.msra.mxu0 %v2430
      %2608 = vmatprep.subr.mxu0 0.0
      %2609 = vmatpush1.msra.mxu0 %v2431
      %2610 = vmatprep.subr.mxu0 0.0
      %2611 = vmatpush1.msra.mxu0 %v2432
      %2612 = vmatprep.subr.mxu0 0.0
      %2613 = vmatpush1.msra.mxu0 %v2433
      %2614 = vmatprep.subr.mxu0 0.0
      %2615 = vmatpush1.msra.mxu0 %v2434
      %2616 = vmatprep.subr.mxu0 0.0
      %2617 = vmatpush1.msra.mxu0 %v2435
      %2618 = vmatprep.subr.mxu0 0.0
      %2619 = vmatpush1.msra.mxu0 %v2436
      %2620 = vmatprep.subr.mxu0 0.0
      %2621 = vmatpush1.msra.mxu0 %v2437
      %2622 = vmatprep.mubr.f32.mxu0 %v2486
      %2623 = vmatmul.mubr.f32.gmra.mrb[0].mxu0 %v2485
      %v2624 = vpop.f32.mrb[0].mxu0
      %v2625 = vadd.f32 %v2555, %v2624
      %v2626 = vpop.f32.mrb[0].mxu0
      %2627 = vdwg.mxu0
      %v2628 = vadd.f32 %v2487, %v2625
      %2629 = vst.msk [vmem:[#allocation2] sm:$0xff] %vm1796, %v2628
      // Predicated region
      $region61: #{mlpnet_forward.2} parent=55 // pred_check
        %p2630 = pneg %p404
      $region62: #{mlpnet_forward.2} parent=55 // pred_check_branch
        %2632 = sbr.rel (%p2630) target = $region64
      $region63: #{mlpnet_forward.2} parent=55 // pred_region
        %v2633 = vld [vmem:[#allocation2] sm:$0xff]
        %2634 = vst.msk [vmem:[%s403] sm:$0xff] %vm1796, %v2633
      $region64: #{mlpnet_forward.2} parent=55 // pred_fallthru
        _
      %p2635 = scmp.lt.s32.totalorder %s24, 1
      %s2636 = scalar_select %p2635, %s24, 1
      %s2637 = smul.addr %s2636, 8
      %s2638 = scalar_lea.vmem %s9, %s2637
      // Predicated region
      $region65: #{mlpnet_forward.2} parent=55 // pred_check
        %p2639 = pneg %p260
      $region66: #{mlpnet_forward.2} parent=55 // pred_check_branch
        %2641 = sbr.rel (%p2639) target = $region68
      $region67: #{mlpnet_forward.2} parent=55 // pred_region
        _
      $region68: #{mlpnet_forward.2} parent=55 // pred_fallthru
        _
    $region56: #{mlpnet_forward.2} parent=5 // pred_fallthru
      _
    %p2642 = scmp.le.s32.totalorder 2, %s15
    // Predicated region
    $region69: #{mlpnet_forward.2} parent=5 // pred_check
      %p2643 = pneg %p2642
    $region70: #{mlpnet_forward.2} parent=5 // pred_check_branch
      %2645 = sbr.rel (%p2643) target = $region72
    $region71: #{mlpnet_forward.2} parent=5 // pred_region
      %s2646 = ssub.s32 %s15, 2
      // Predicated region
      $region73: #{mlpnet_forward.2} parent=71 // pred_check
        %p2647 = pneg %p266
      $region74: #{mlpnet_forward.2} parent=71 // pred_check_branch
        %2649 = sbr.rel (%p2647) target = $region76
      $region75: #{mlpnet_forward.2} parent=71 // pred_region
        %p2650 = scmp.lt.s32.totalorder %s26, 1
        %s2651 = scalar_select %p2650, %s26, 1
        %s2652 = smul.addr %s2651, 8
        %s2653 = scalar_lea.vmem %s9, %s2652
      $region76: #{mlpnet_forward.2} parent=71 // pred_fallthru
        _
    $region72: #{mlpnet_forward.2} parent=5 // pred_fallthru
      _
  $region6: #{mlpnet_forward.2} parent=0 // loop_footer
    %s19 = sadd.s32 1, %s15
  $region7: #{mlpnet_forward.2} parent=0 // loop_footer_branch
    %14 = sbr.rel target = $region3
  $region8: #{mlpnet_forward.2} parent=0 // loop_exit
    _

</llo_original>
